<compile_context>
chip_gen: v7x
topology: tpu7x:2x2x1
jax: 0.10.0
libtpu: 0.0.40
codegen_flags: <defaults>
</compile_context>

<pallas_src>
import math

import jax
import jax.numpy as jnp
from jax.experimental import pallas as pl
from jax.experimental.pallas import tpu as pltpu


def _mlp_kernel(t_ref, x_ref, w1x_ref, w1t_ref, b1_ref,
                w2_ref, b2_ref, w3_ref, b3_ref, out_ref):
    """One batch tile of the 3-layer MLP, fully in VMEM."""
    x_bf = x_ref[...].astype(jnp.bfloat16)          # no-op when x is bf16

    # Layer 1: Linear([t, x] -> H) without materializing the concat:
    #   h1 = x @ w1_x + t * w1_t + b1
    h1 = jnp.dot(x_bf, w1x_ref[...], preferred_element_type=jnp.float32)
    h1 = h1 + t_ref[...] * w1t_ref[...] + b1_ref[...]
    h1 = h1 * jax.nn.sigmoid(h1)                    # SiLU in f32 (EUP)

    # Layer 2: Linear(H -> H) + SiLU
    h2 = jnp.dot(h1.astype(jnp.bfloat16), w2_ref[...],
                 preferred_element_type=jnp.float32)
    h2 = h2 + b2_ref[...]
    h2 = h2 * jax.nn.sigmoid(h2)                    # SiLU in f32 (EUP)

    # Layer 3: Linear(H -> D)
    o = jnp.dot(h2.astype(jnp.bfloat16), w3_ref[...],
                preferred_element_type=jnp.float32)
    out_ref[...] = (o + b3_ref[...]).astype(out_ref.dtype)


def _round_up(x, m):
    return ((x + m - 1) // m) * m


def _choose_tiles(batch):
    """Pick (tile_b, padded_b) for the batch grid.

    batch <= 256: one tile covering the whole (un-padded) batch — block equals
    the full array dim, so no sublane constraint and no jnp.pad copy of x.
    Larger batches: tiles of up to 1024 rows, at least 2 grid steps (so the
    "parallel" axis shards across v7x's two TensorCores), rows rounded to 16
    for bf16 sublane packing.
    """
    if batch <= 256:
        return batch, batch
    num_tiles = max(2, -(-batch // 1024))
    tile_b = _round_up(-(-batch // num_tiles), 16)
    return tile_b, tile_b * num_tiles


def _vmem_capacity_bytes():
    try:
        return int(pltpu.get_tpu_info().vmem_capacity_bytes)
    except Exception:
        return 64 << 20          # conservative (v7x has the smallest VMEM)


def vector_field_forward(t, x, params, out_dtype=None):
    """Pallas-backed forward of VectorField.

    t: (B,) or (B, 1) float time values.
    x: (B, C, H, W) images (NCHW); ideally already bf16 from the producer.
    params: dict produced by init_params().
    out_dtype: output dtype; defaults to x.dtype (bf16 in/out keeps the
               HBM-bound kernel at ~2x less traffic than f32).
    """
    batch = x.shape[0]
    x_flat = x.reshape(batch, -1)                        # keep producer dtype
    t_col = t.reshape(-1, 1).astype(jnp.float32)         # (B, 1), tiny
    image_dim = x_flat.shape[1]
    if out_dtype is None:
        out_dtype = x.dtype

    w1x, w1t, b1 = params["w1_x"], params["w1_t"], params["b1"]
    w2, b2 = params["w2"], params["b2"]
    w3, b3 = params["w3"], params["b3"]
    hidden_dim = w2.shape[0]

    tile_b, padded_b = _choose_tiles(batch)
    if padded_b != batch:
        # TODO(synk): for awkward batch sizes handle the ragged tail in a
        # small second call instead of materializing a padded copy of x.
        pad = padded_b - batch
        x_flat = jnp.pad(x_flat, ((0, pad), (0, 0)))
        t_col = jnp.pad(t_col, ((0, pad), (0, 0)))

    grid = (padded_b // tile_b,)

    def row_spec(shape):      # batch-tiled arrays
        return pl.BlockSpec(shape, lambda i: (i, 0))

    def fixed_spec(shape):    # weights/biases: resident in VMEM across steps
        return pl.BlockSpec(shape, lambda i: (0, 0))

    # VMEM budget: resident weights (x2 for default double-buffering), the
    # double-buffered t/x/out tiles, plus in-kernel temporaries (h1/h2 in f32
    # and their bf16 casts, f32 output before the store cast).  Clamped to the
    # physical per-generation capacity, never below the 32 MiB default scope.
    nbytes = lambda a: a.size * a.dtype.itemsize
    weight_bytes = (nbytes(w1x) + nbytes(w2) + nbytes(w3)
                    + nbytes(w1t) + nbytes(b1) + nbytes(b2) + nbytes(b3))
    in_tile = tile_b * (image_dim * x_flat.dtype.itemsize + 4)      # x + t
    out_tile = tile_b * image_dim * jnp.dtype(out_dtype).itemsize
    temp_bytes = tile_b * (image_dim * 4 + hidden_dim * 12)
    need = 2 * weight_bytes + 2 * in_tile + 2 * out_tile + temp_bytes
    vmem_cap = _vmem_capacity_bytes()
    vmem_limit = int(need * 1.25) + (8 << 20)
    vmem_limit = max(vmem_limit, 32 << 20)
    vmem_limit = min(vmem_limit, vmem_cap - (2 << 20))

    cost = pl.CostEstimate(
        flops=2 * padded_b * (2 * image_dim * hidden_dim
                              + hidden_dim * hidden_dim),
        transcendentals=2 * padded_b * hidden_dim,
        bytes_accessed=(padded_b * (in_tile + out_tile) // tile_b
                        + weight_bytes),
    )

    out_flat = pl.pallas_call(
        _mlp_kernel,
        out_shape=jax.ShapeDtypeStruct((padded_b, image_dim), out_dtype),
        grid=grid,
        in_specs=[
            row_spec((tile_b, 1)),                  # t   (f32)
            row_spec((tile_b, image_dim)),          # x   (bf16 from producer)
            fixed_spec((image_dim, hidden_dim)),    # w1_x (bf16)
            fixed_spec((1, hidden_dim)),            # w1_t (f32, tiny)
            fixed_spec((1, hidden_dim)),            # b1
            fixed_spec((hidden_dim, hidden_dim)),   # w2 (bf16)
            fixed_spec((1, hidden_dim)),            # b2
            fixed_spec((hidden_dim, image_dim)),    # w3 (bf16)
            fixed_spec((1, image_dim)),             # b3
        ],
        out_specs=row_spec((tile_b, image_dim)),
        compiler_params=pltpu.CompilerParams(
            dimension_semantics=("parallel",),      # shards batch tiles on v7x
            vmem_limit_bytes=vmem_limit,
        ),
        cost_estimate=cost,
    )(t_col, x_flat, w1x, w1t, b1, w2, b2, w3, b3)

    if padded_b != batch:
        out_flat = out_flat[:batch]
    return out_flat.reshape(x.shape)


def init_params(key, image_dim, hidden_dim=256):
    """Init mirroring the PyTorch weight_init().

    Matmul weights are stored as (in, out) bfloat16; the tiny t-row of layer 1
    and all biases stay f32.  Keep hidden_dim a multiple of 256 on v6e/v7x
    (128 on v5e) so no MXU pass is padded.
    """
    k1, k2, k3 = jax.random.split(key, 3)

    def xavier_normal(k, fan_in, fan_out):
        std = math.sqrt(2.0 / (fan_in + fan_out))
        return std * jax.random.normal(k, (fan_in, fan_out), dtype=jnp.float32)

    w1_full = xavier_normal(k1, image_dim + 1, hidden_dim)   # rows: [t, x...]
    w2 = xavier_normal(k2, hidden_dim, hidden_dim)
    w3 = 0.01 * jax.random.normal(k3, (hidden_dim, image_dim),
                                  dtype=jnp.float32)

    return {
        "w1_x": w1_full[1:].astype(jnp.bfloat16),            # (D, H)
        "w1_t": w1_full[:1],                                  # (1, H) f32
        "b1": jnp.zeros((1, hidden_dim), jnp.float32),
        "w2": w2.astype(jnp.bfloat16),
        "b2": jnp.zeros((1, hidden_dim), jnp.float32),
        "w3": w3.astype(jnp.bfloat16),
        "b3": jnp.zeros((1, image_dim), jnp.float32),
    }


def _reference_forward(t, x, params):
    """Pure-JAX f32 reference (same bf16-rounded weights/inputs, f32 math)."""
    b = x.shape[0]
    x_flat = x.reshape(b, -1).astype(jnp.float32)
    t_col = t.reshape(-1, 1).astype(jnp.float32)
    w1x = params["w1_x"].astype(jnp.float32)
    w2 = params["w2"].astype(jnp.float32)
    w3 = params["w3"].astype(jnp.float32)

    h1 = x_flat @ w1x + t_col * params["w1_t"] + params["b1"]
    h1 = h1 * jax.nn.sigmoid(h1)
    h2 = h1 @ w2 + params["b2"]
    h2 = h2 * jax.nn.sigmoid(h2)
    out = h2 @ w3 + params["b3"]
    return out.reshape(x.shape)


if __name__ == "__main__":
    key = jax.random.PRNGKey(0)
    k_param, k_x, k_t = jax.random.split(key, 3)

    B, C, H, W = 2, 4, 16, 16          # small NCHW input
    image_dim = C * H * W              # 1024
    hidden_dim = 256

    params = init_params(k_param, image_dim, hidden_dim)
    # Producer writes bf16 directly (no separate wrapper cast of a f32 array):
    x = jax.random.normal(k_x, (B, C, H, W), dtype=jnp.bfloat16)
    t = jax.random.uniform(k_t, (B,), dtype=jnp.float32)

    out = jax.block_until_ready(vector_field_forward(t, x, params))
    ref = jax.block_until_ready(_reference_forward(t, x, params))

    assert out.shape == x.shape and out.dtype == x.dtype
    # bf16 MXU operands / bf16 output with f32 accumulation -> loose tolerance.
    err = float(jnp.max(jnp.abs(out.astype(jnp.float32) - ref)))
    assert jnp.allclose(out.astype(jnp.float32), ref,
                        atol=2e-2, rtol=2e-2), err

    print("KERNEL_OK")
</pallas_src>

<mosaic_0001>
module attributes {stable_mosaic.version = 11 : i64} {
  func.func @_mlp_kernel(%arg0: i32, %arg1: memref<2x1xf32, #tpu.memory_space<vmem>>, %arg2: memref<2x1024xbf16, #tpu.memory_space<vmem>>, %arg3: memref<1024x256xbf16, #tpu.memory_space<vmem>>, %arg4: memref<1x256xf32, #tpu.memory_space<vmem>>, %arg5: memref<1x256xf32, #tpu.memory_space<vmem>>, %arg6: memref<256x256xbf16, #tpu.memory_space<vmem>>, %arg7: memref<1x256xf32, #tpu.memory_space<vmem>>, %arg8: memref<256x1024xbf16, #tpu.memory_space<vmem>>, %arg9: memref<1x1024xf32, #tpu.memory_space<vmem>>, %arg10: memref<2x1024xbf16, #tpu.memory_space<vmem>>) attributes {dimension_semantics = [#tpu.dimension_semantics<parallel>], iteration_bounds = array<i64: 1>, scalar_prefetch = 0 : i64, scratch_operands = 0 : i64, tpu.core_type = #tpu.core_type<tc>, window_params = [{transform_indices = @transform_0, window_bounds = array<i64: 2, 1>}, {transform_indices = @transform_1, window_bounds = array<i64: 2, 1024>}, {pipeline_mode = #tpu.pipeline_mode<synchronous>, transform_indices = @transform_2, window_bounds = array<i64: 1024, 256>}, {pipeline_mode = #tpu.pipeline_mode<synchronous>, transform_indices = @transform_3, window_bounds = array<i64: 1, 256>}, {pipeline_mode = #tpu.pipeline_mode<synchronous>, transform_indices = @transform_4, window_bounds = array<i64: 1, 256>}, {pipeline_mode = #tpu.pipeline_mode<synchronous>, transform_indices = @transform_5, window_bounds = array<i64: 256, 256>}, {pipeline_mode = #tpu.pipeline_mode<synchronous>, transform_indices = @transform_6, window_bounds = array<i64: 1, 256>}, {pipeline_mode = #tpu.pipeline_mode<synchronous>, transform_indices = @transform_7, window_bounds = array<i64: 256, 1024>}, {pipeline_mode = #tpu.pipeline_mode<synchronous>, transform_indices = @transform_8, window_bounds = array<i64: 1, 1024>}, {transform_indices = @transform_9, window_bounds = array<i64: 2, 1024>}]} {
    %c0 = arith.constant 0 : index
    %c0_0 = arith.constant 0 : index
    %0 = vector.load %arg2[%c0, %c0_0] : memref<2x1024xbf16, #tpu.memory_space<vmem>>, vector<2x1024xbf16>
    %c0_1 = arith.constant 0 : index
    %c0_2 = arith.constant 0 : index
    %1 = vector.load %arg3[%c0_1, %c0_2] : memref<1024x256xbf16, #tpu.memory_space<vmem>>, vector<1024x256xbf16>
    %cst = arith.constant dense<0.000000e+00> : vector<2x256xf32>
    %2 = tpu.matmul %0, %1, %cst {dimension_numbers = #tpu.dot_dimension_numbers<[1], [0], [0], [1], [0, 0, 1, 1], [], []>} : vector<2x1024xbf16>, vector<1024x256xbf16>, vector<2x256xf32> -> vector<2x256xf32>
    %c0_3 = arith.constant 0 : index
    %c0_4 = arith.constant 0 : index
    %3 = vector.load %arg1[%c0_3, %c0_4] : memref<2x1xf32, #tpu.memory_space<vmem>>, vector<2x1xf32>
    %c0_5 = arith.constant 0 : index
    %c0_6 = arith.constant 0 : index
    %4 = vector.load %arg4[%c0_5, %c0_6] : memref<1x256xf32, #tpu.memory_space<vmem>>, vector<1x256xf32>
    %5 = vector.broadcast %3 : vector<2x1xf32> to vector<2x256xf32>
    %6 = vector.broadcast %4 : vector<1x256xf32> to vector<2x256xf32>
    %7 = arith.mulf %5, %6 : vector<2x256xf32>
    %8 = arith.addf %2, %7 : vector<2x256xf32>
    %c0_7 = arith.constant 0 : index
    %c0_8 = arith.constant 0 : index
    %9 = vector.load %arg5[%c0_7, %c0_8] : memref<1x256xf32, #tpu.memory_space<vmem>>, vector<1x256xf32>
    %10 = vector.broadcast %9 : vector<1x256xf32> to vector<2x256xf32>
    %11 = arith.addf %8, %10 : vector<2x256xf32>
    %12 = arith.negf %11 : vector<2x256xf32>
    %13 = math.exp %12 : vector<2x256xf32>
    %cst_9 = arith.constant 1.000000e+00 : f32
    %14 = vector.broadcast %cst_9 : f32 to vector<2x256xf32>
    %15 = arith.addf %14, %13 : vector<2x256xf32>
    %16 = arith.divf %14, %15 : vector<2x256xf32>
    %17 = arith.mulf %11, %16 : vector<2x256xf32>
    %18 = arith.truncf %17 : vector<2x256xf32> to vector<2x256xbf16>
    %c0_10 = arith.constant 0 : index
    %c0_11 = arith.constant 0 : index
    %19 = vector.load %arg6[%c0_10, %c0_11] : memref<256x256xbf16, #tpu.memory_space<vmem>>, vector<256x256xbf16>
    %cst_12 = arith.constant dense<0.000000e+00> : vector<2x256xf32>
    %20 = tpu.matmul %18, %19, %cst_12 {dimension_numbers = #tpu.dot_dimension_numbers<[1], [0], [0], [1], [0, 0, 1, 1], [], []>} : vector<2x256xbf16>, vector<256x256xbf16>, vector<2x256xf32> -> vector<2x256xf32>
    %c0_13 = arith.constant 0 : index
    %c0_14 = arith.constant 0 : index
    %21 = vector.load %arg7[%c0_13, %c0_14] : memref<1x256xf32, #tpu.memory_space<vmem>>, vector<1x256xf32>
    %22 = vector.broadcast %21 : vector<1x256xf32> to vector<2x256xf32>
    %23 = arith.addf %20, %22 : vector<2x256xf32>
    %24 = arith.negf %23 : vector<2x256xf32>
    %25 = math.exp %24 : vector<2x256xf32>
    %cst_15 = arith.constant 1.000000e+00 : f32
    %26 = vector.broadcast %cst_15 : f32 to vector<2x256xf32>
    %27 = arith.addf %26, %25 : vector<2x256xf32>
    %28 = arith.divf %26, %27 : vector<2x256xf32>
    %29 = arith.mulf %23, %28 : vector<2x256xf32>
    %30 = arith.truncf %29 : vector<2x256xf32> to vector<2x256xbf16>
    %c0_16 = arith.constant 0 : index
    %c0_17 = arith.constant 0 : index
    %31 = vector.load %arg8[%c0_16, %c0_17] : memref<256x1024xbf16, #tpu.memory_space<vmem>>, vector<256x1024xbf16>
    %cst_18 = arith.constant dense<0.000000e+00> : vector<2x1024xf32>
    %32 = tpu.matmul %30, %31, %cst_18 {dimension_numbers = #tpu.dot_dimension_numbers<[1], [0], [0], [1], [0, 0, 1, 1], [], []>} : vector<2x256xbf16>, vector<256x1024xbf16>, vector<2x1024xf32> -> vector<2x1024xf32>
    %c0_19 = arith.constant 0 : index
    %c0_20 = arith.constant 0 : index
    %33 = vector.load %arg9[%c0_19, %c0_20] : memref<1x1024xf32, #tpu.memory_space<vmem>>, vector<1x1024xf32>
    %34 = vector.broadcast %33 : vector<1x1024xf32> to vector<2x1024xf32>
    %35 = arith.addf %32, %34 : vector<2x1024xf32>
    %36 = arith.truncf %35 : vector<2x1024xf32> to vector<2x1024xbf16>
    %c0_21 = arith.constant 0 : index
    %c0_22 = arith.constant 0 : index
    %37 = vector.load %arg10[%c0_21, %c0_22] : memref<2x1024xbf16, #tpu.memory_space<vmem>>, vector<2x1024xbf16>
    tpu.vector_store %arg10[%c0_21, %c0_22], %36 {strides = array<i32>} : memref<2x1024xbf16, #tpu.memory_space<vmem>>, vector<2x1024xbf16>,
    return
  }
  func.func @transform_0(%arg0: i32) -> (i32, i32) {
    %c0_i32 = arith.constant 0 : i32
    %c0_i32_0 = arith.constant 0 : i32
    return %arg0, %c0_i32 : i32, i32
  }
  func.func @transform_1(%arg0: i32) -> (i32, i32) {
    %c0_i32 = arith.constant 0 : i32
    %c0_i32_0 = arith.constant 0 : i32
    return %arg0, %c0_i32 : i32, i32
  }
  func.func @transform_2(%arg0: i32) -> (i32, i32) {
    %c0_i32 = arith.constant 0 : i32
    %c0_i32_0 = arith.constant 0 : i32
    %c0_i32_1 = arith.constant 0 : i32
    return %c0_i32, %c0_i32_0 : i32, i32
  }
  func.func @transform_3(%arg0: i32) -> (i32, i32) {
    %c0_i32 = arith.constant 0 : i32
    %c0_i32_0 = arith.constant 0 : i32
    %c0_i32_1 = arith.constant 0 : i32
    return %c0_i32, %c0_i32_0 : i32, i32
  }
  func.func @transform_4(%arg0: i32) -> (i32, i32) {
    %c0_i32 = arith.constant 0 : i32
    %c0_i32_0 = arith.constant 0 : i32
    %c0_i32_1 = arith.constant 0 : i32
    return %c0_i32, %c0_i32_0 : i32, i32
  }
  func.func @transform_5(%arg0: i32) -> (i32, i32) {
    %c0_i32 = arith.constant 0 : i32
    %c0_i32_0 = arith.constant 0 : i32
    %c0_i32_1 = arith.constant 0 : i32
    return %c0_i32, %c0_i32_0 : i32, i32
  }
  func.func @transform_6(%arg0: i32) -> (i32, i32) {
    %c0_i32 = arith.constant 0 : i32
    %c0_i32_0 = arith.constant 0 : i32
    %c0_i32_1 = arith.constant 0 : i32
    return %c0_i32, %c0_i32_0 : i32, i32
  }
  func.func @transform_7(%arg0: i32) -> (i32, i32) {
    %c0_i32 = arith.constant 0 : i32
    %c0_i32_0 = arith.constant 0 : i32
    %c0_i32_1 = arith.constant 0 : i32
    return %c0_i32, %c0_i32_0 : i32, i32
  }
  func.func @transform_8(%arg0: i32) -> (i32, i32) {
    %c0_i32 = arith.constant 0 : i32
    %c0_i32_0 = arith.constant 0 : i32
    %c0_i32_1 = arith.constant 0 : i32
    return %c0_i32, %c0_i32_0 : i32, i32
  }
  func.func @transform_9(%arg0: i32) -> (i32, i32) {
    %c0_i32 = arith.constant 0 : i32
    %c0_i32_0 = arith.constant 0 : i32
    return %arg0, %c0_i32 : i32, i32
  }
}

</mosaic_0001>

<llo_original>
// kernel: tpu_custom_call.1
$region0: #{tpu_custom_call.1}
  #allocation0 [shape = 'u32[]', space=smem, size = 0x4, offset = 0x4, fixed_abs, tag = 'smem constant byte address 0x4 - core index']
  #allocation1 [shape = 'u32[144,128]{1,0:T(1,128)}', space=vmem, size = 0x12000, scoped, tag = 'internal scratch']
  %s0 = inlined_call_operand.vmem [shape: f32[2,1], index: 0, kind: input, shape index: {}]
  %s1 = inlined_call_operand.hbm [shape: bf16[2,1024], index: 1, kind: input, shape index: {}]
  %s2 = inlined_call_operand.hbm [shape: bf16[1024,256], index: 2, kind: input, shape index: {}]
  %s3 = inlined_call_operand.vmem [shape: f32[1,256], index: 3, kind: input, shape index: {}]
  %s4 = inlined_call_operand.vmem [shape: f32[1,256], index: 4, kind: input, shape index: {}]
  %s5 = inlined_call_operand.hbm [shape: bf16[256,256], index: 5, kind: input, shape index: {}]
  %s6 = inlined_call_operand.vmem [shape: f32[1,256], index: 6, kind: input, shape index: {}]
  %s7 = inlined_call_operand.hbm [shape: bf16[256,1024], index: 7, kind: input, shape index: {}]
  %s8 = inlined_call_operand.vmem [shape: f32[1,1024], index: 8, kind: input, shape index: {}]
  %s9 = inlined_call_operand.hbm [shape: bf16[2,1024], index: 9, kind: output, shape index: {}]
  %s10 = sld [smem:[#allocation0]]
  $region62: #{tpu_custom_call.1} parent=0
    _
  %s12 = ssub.s32 1, %s10
  %s13 = scalar_select 0, %s12, %s10
  $region1: #{tpu_custom_call.1} parent=0
    #allocation2 [shape = 'u8[4096]{0}', space=vmem, size = 0x1000, scoped, tag = 'input window, operand 1, single buffered']
    #allocation3 [shape = 's32[1]{0}', space=sflag, size = 0x4, scoped, tag = 'scoped memory for tpu_custom_call.1']
    #allocation4 [shape = 's32[1]{0}', space=sflag, size = 0x4, scoped, tag = 'scoped memory for tpu_custom_call.1']
    #allocation5 [shape = 'u8[524288]{0}', space=vmem, size = 0x80000, scoped, tag = 'input window, operand 2, single buffered']
    #allocation6 [shape = 's32[1]{0}', space=sflag, size = 0x4, scoped, tag = 'scoped memory for tpu_custom_call.1']
    #allocation7 [shape = 'u8[131072]{0}', space=vmem, size = 0x20000, scoped, tag = 'input window, operand 5, single buffered']
    #allocation8 [shape = 'u8[524288]{0}', space=vmem, size = 0x80000, scoped, tag = 'input window, operand 7, single buffered']
    #allocation9 [shape = 's32[1]{0}', space=sflag, size = 0x4, scoped, tag = 'scoped memory for tpu_custom_call.1']
    #allocation10 [shape = 'u8[4096]{0}', space=vmem, size = 0x1000, scoped, tag = 'output window, operand 0, single buffered']
    %14 = vsyncpa [#allocation3], 0
    %15 = vsyncpa [#allocation6], 0
    %16 = vsyncpa [#allocation9], 0
    %17 = vsyncpa [#allocation4], 0
    // Predicated region
    $region2: #{tpu_custom_call.1} parent=1 // pred_check
      _
    $region3: #{tpu_custom_call.1} parent=1 // pred_check_branch
      %19 = sbr.rel (0) target = $region5
    $region4: #{tpu_custom_call.1} parent=1 // pred_region
      _
    $region5: #{tpu_custom_call.1} parent=1 // pred_fallthru
      _
    // Predicated region
    $region6: #{tpu_custom_call.1} parent=1 // pred_check
      _
    $region7: #{tpu_custom_call.1} parent=1 // pred_check_branch
      %21 = sbr.rel (0) target = $region9
    $region8: #{tpu_custom_call.1} parent=1 // pred_region
      %s23 = ssub.s32 128, 128
      %24 = vsyncadd [#allocation3], %s23
      %s26 = sshll.u32 [#allocation2], 4
      %s27 = int_to_ptr.vmem [resolvable:$true] %s26
      %29 = dma.hbm_to_vmem [thread:$0]  %s1, 128, %s27, [#allocation3]
    $region9: #{tpu_custom_call.1} parent=1 // pred_fallthru
      _
    // Predicated region
    $region10: #{tpu_custom_call.1} parent=1 // pred_check
      _
    $region11: #{tpu_custom_call.1} parent=1 // pred_check_branch
      %31 = sbr.rel (0) target = $region13
    $region12: #{tpu_custom_call.1} parent=1 // pred_region
      %s33 = ssub.s32 16384, 16384
      %34 = vsyncadd [#allocation6], %s33
      %s35 = sshll.u32 [#allocation5], 4
      %s36 = int_to_ptr.vmem [resolvable:$true] %s35
      %41 = dma.hbm_to_vmem [thread:$0]  %s2, 16384, %s36, [#allocation6], 128, 128, 8
    $region13: #{tpu_custom_call.1} parent=1 // pred_fallthru
      _
    // Predicated region
    $region14: #{tpu_custom_call.1} parent=1 // pred_check
      _
    $region15: #{tpu_custom_call.1} parent=1 // pred_check_branch
      %43 = sbr.rel (0) target = $region17
    $region16: #{tpu_custom_call.1} parent=1 // pred_region
      _
    $region17: #{tpu_custom_call.1} parent=1 // pred_fallthru
      _
    // Predicated region
    $region18: #{tpu_custom_call.1} parent=1 // pred_check
      _
    $region19: #{tpu_custom_call.1} parent=1 // pred_check_branch
      %45 = sbr.rel (0) target = $region21
    $region20: #{tpu_custom_call.1} parent=1 // pred_region
      _
    $region21: #{tpu_custom_call.1} parent=1 // pred_fallthru
      _
    // Predicated region
    $region22: #{tpu_custom_call.1} parent=1 // pred_check
      _
    $region23: #{tpu_custom_call.1} parent=1 // pred_check_branch
      %47 = sbr.rel (0) target = $region25
    $region24: #{tpu_custom_call.1} parent=1 // pred_region
      %s49 = ssub.s32 4096, 4096
      %50 = vsyncadd [#allocation6], %s49
      %s51 = sshll.u32 [#allocation7], 4
      %s52 = int_to_ptr.vmem [resolvable:$true] %s51
      %57 = dma.hbm_to_vmem [thread:$0]  %s5, 4096, %s52, [#allocation6], 128, 128, 8
    $region25: #{tpu_custom_call.1} parent=1 // pred_fallthru
      _
    // Predicated region
    $region26: #{tpu_custom_call.1} parent=1 // pred_check
      _
    $region27: #{tpu_custom_call.1} parent=1 // pred_check_branch
      %59 = sbr.rel (0) target = $region29
    $region28: #{tpu_custom_call.1} parent=1 // pred_region
      _
    $region29: #{tpu_custom_call.1} parent=1 // pred_fallthru
      _
    // Predicated region
    $region30: #{tpu_custom_call.1} parent=1 // pred_check
      _
    $region31: #{tpu_custom_call.1} parent=1 // pred_check_branch
      %61 = sbr.rel (0) target = $region33
    $region32: #{tpu_custom_call.1} parent=1 // pred_region
      %s63 = ssub.s32 16384, 16384
      %64 = vsyncadd [#allocation9], %s63
      %s65 = sshll.u32 [#allocation8], 4
      %s66 = int_to_ptr.vmem [resolvable:$true] %s65
      %71 = dma.hbm_to_vmem [thread:$0]  %s7, 16384, %s66, [#allocation9], 512, 512, 32
    $region33: #{tpu_custom_call.1} parent=1 // pred_fallthru
      _
    // Predicated region
    $region34: #{tpu_custom_call.1} parent=1 // pred_check
      _
    $region35: #{tpu_custom_call.1} parent=1 // pred_check_branch
      %73 = sbr.rel (0) target = $region37
    $region36: #{tpu_custom_call.1} parent=1 // pred_region
      _
    $region37: #{tpu_custom_call.1} parent=1 // pred_fallthru
      _
    // Predicated region
    $region38: #{tpu_custom_call.1} parent=1 // pred_check
      _
    $region39: #{tpu_custom_call.1} parent=1 // pred_check_branch
      %75 = sbr.rel (0) target = $region41
    $region40: #{tpu_custom_call.1} parent=1 // pred_region
      %76 = dma.done [#allocation3], 128
    $region41: #{tpu_custom_call.1} parent=1 // pred_fallthru
      _
    // Predicated region
    $region42: #{tpu_custom_call.1} parent=1 // pred_check
      _
    $region43: #{tpu_custom_call.1} parent=1 // pred_check_branch
      %78 = sbr.rel (0) target = $region45
    $region44: #{tpu_custom_call.1} parent=1 // pred_region
      %79 = dma.done [#allocation6], 16384
    $region45: #{tpu_custom_call.1} parent=1 // pred_fallthru
      _
    // Predicated region
    $region46: #{tpu_custom_call.1} parent=1 // pred_check
      _
    $region47: #{tpu_custom_call.1} parent=1 // pred_check_branch
      %81 = sbr.rel (0) target = $region49
    $region48: #{tpu_custom_call.1} parent=1 // pred_region
      %82 = dma.done [#allocation6], 4096
    $region49: #{tpu_custom_call.1} parent=1 // pred_fallthru
      _
    // Predicated region
    $region50: #{tpu_custom_call.1} parent=1 // pred_check
      _
    $region51: #{tpu_custom_call.1} parent=1 // pred_check_branch
      %84 = sbr.rel (0) target = $region53
    $region52: #{tpu_custom_call.1} parent=1 // pred_region
      %85 = dma.done [#allocation9], 16384
    $region53: #{tpu_custom_call.1} parent=1 // pred_fallthru
      _
    %v86 = vld [vmem:[#allocation2] sm:$0xff]
    %v87 = vld [vmem:[#allocation5] sm:$0xff]
    %v88 = vld [vmem:[#allocation5 + $0x8] sm:$0xff]
    %v89 = vld [vmem:[#allocation5 + $0x10] sm:$0xff]
    %v90 = vld [vmem:[#allocation5 + $0x18] sm:$0xff]
    %v91 = vld [vmem:[#allocation5 + $0x20] sm:$0xff]
    %v92 = vld [vmem:[#allocation5 + $0x28] sm:$0xff]
    %v93 = vld [vmem:[#allocation5 + $0x30] sm:$0xff]
    %v94 = vld [vmem:[#allocation5 + $0x38] sm:$0xff]
    %v95 = vld [vmem:[#allocation5 + $0x40] sm:$0xff]
    %v96 = vld [vmem:[#allocation5 + $0x48] sm:$0xff]
    %v97 = vld [vmem:[#allocation5 + $0x50] sm:$0xff]
    %v98 = vld [vmem:[#allocation5 + $0x58] sm:$0xff]
    %v99 = vld [vmem:[#allocation5 + $0x60] sm:$0xff]
    %v100 = vld [vmem:[#allocation5 + $0x68] sm:$0xff]
    %v101 = vld [vmem:[#allocation5 + $0x70] sm:$0xff]
    %v102 = vld [vmem:[#allocation5 + $0x78] sm:$0xff]
    %v103 = vld [vmem:[#allocation5 + $0x80] sm:$0xff]
    %v104 = vld [vmem:[#allocation5 + $0x88] sm:$0xff]
    %v105 = vld [vmem:[#allocation5 + $0x90] sm:$0xff]
    %v106 = vld [vmem:[#allocation5 + $0x98] sm:$0xff]
    %v107 = vld [vmem:[#allocation5 + $0xa0] sm:$0xff]
    %v108 = vld [vmem:[#allocation5 + $0xa8] sm:$0xff]
    %v109 = vld [vmem:[#allocation5 + $0xb0] sm:$0xff]
    %v110 = vld [vmem:[#allocation5 + $0xb8] sm:$0xff]
    %v111 = vld [vmem:[#allocation5 + $0xc0] sm:$0xff]
    %v112 = vld [vmem:[#allocation5 + $0xc8] sm:$0xff]
    %v113 = vld [vmem:[#allocation5 + $0xd0] sm:$0xff]
    %v114 = vld [vmem:[#allocation5 + $0xd8] sm:$0xff]
    %v115 = vld [vmem:[#allocation5 + $0xe0] sm:$0xff]
    %v116 = vld [vmem:[#allocation5 + $0xe8] sm:$0xff]
    %v117 = vld [vmem:[#allocation5 + $0xf0] sm:$0xff]
    %v118 = vld [vmem:[#allocation5 + $0xf8] sm:$0xff]
    %v119 = vld [vmem:[#allocation5 + $0x100] sm:$0xff]
    %v120 = vld [vmem:[#allocation5 + $0x108] sm:$0xff]
    %v121 = vld [vmem:[#allocation5 + $0x110] sm:$0xff]
    %v122 = vld [vmem:[#allocation5 + $0x118] sm:$0xff]
    %v123 = vld [vmem:[#allocation5 + $0x120] sm:$0xff]
    %v124 = vld [vmem:[#allocation5 + $0x128] sm:$0xff]
    %v125 = vld [vmem:[#allocation5 + $0x130] sm:$0xff]
    %v126 = vld [vmem:[#allocation5 + $0x138] sm:$0xff]
    %v127 = vld [vmem:[#allocation5 + $0x140] sm:$0xff]
    %v128 = vld [vmem:[#allocation5 + $0x148] sm:$0xff]
    %v129 = vld [vmem:[#allocation5 + $0x150] sm:$0xff]
    %v130 = vld [vmem:[#allocation5 + $0x158] sm:$0xff]
    %v131 = vld [vmem:[#allocation5 + $0x160] sm:$0xff]
    %v132 = vld [vmem:[#allocation5 + $0x168] sm:$0xff]
    %v133 = vld [vmem:[#allocation5 + $0x170] sm:$0xff]
    %v134 = vld [vmem:[#allocation5 + $0x178] sm:$0xff]
    %v135 = vld [vmem:[#allocation5 + $0x180] sm:$0xff]
    %v136 = vld [vmem:[#allocation5 + $0x188] sm:$0xff]
    %v137 = vld [vmem:[#allocation5 + $0x190] sm:$0xff]
    %v138 = vld [vmem:[#allocation5 + $0x198] sm:$0xff]
    %v139 = vld [vmem:[#allocation5 + $0x1a0] sm:$0xff]
    %v140 = vld [vmem:[#allocation5 + $0x1a8] sm:$0xff]
    %v141 = vld [vmem:[#allocation5 + $0x1b0] sm:$0xff]
    %v142 = vld [vmem:[#allocation5 + $0x1b8] sm:$0xff]
    %v143 = vld [vmem:[#allocation5 + $0x1c0] sm:$0xff]
    %v144 = vld [vmem:[#allocation5 + $0x1c8] sm:$0xff]
    %v145 = vld [vmem:[#allocation5 + $0x1d0] sm:$0xff]
    %v146 = vld [vmem:[#allocation5 + $0x1d8] sm:$0xff]
    %v147 = vld [vmem:[#allocation5 + $0x1e0] sm:$0xff]
    %v148 = vld [vmem:[#allocation5 + $0x1e8] sm:$0xff]
    %v149 = vld [vmem:[#allocation5 + $0x1f0] sm:$0xff]
    %v150 = vld [vmem:[#allocation5 + $0x1f8] sm:$0xff]
    %v151 = vld [vmem:[#allocation5 + $0x200] sm:$0xff]
    %v152 = vld [vmem:[#allocation5 + $0x208] sm:$0xff]
    %v153 = vld [vmem:[#allocation5 + $0x210] sm:$0xff]
    %v154 = vld [vmem:[#allocation5 + $0x218] sm:$0xff]
    %v155 = vld [vmem:[#allocation5 + $0x220] sm:$0xff]
    %v156 = vld [vmem:[#allocation5 + $0x228] sm:$0xff]
    %v157 = vld [vmem:[#allocation5 + $0x230] sm:$0xff]
    %v158 = vld [vmem:[#allocation5 + $0x238] sm:$0xff]
    %v159 = vld [vmem:[#allocation5 + $0x240] sm:$0xff]
    %v160 = vld [vmem:[#allocation5 + $0x248] sm:$0xff]
    %v161 = vld [vmem:[#allocation5 + $0x250] sm:$0xff]
    %v162 = vld [vmem:[#allocation5 + $0x258] sm:$0xff]
    %v163 = vld [vmem:[#allocation5 + $0x260] sm:$0xff]
    %v164 = vld [vmem:[#allocation5 + $0x268] sm:$0xff]
    %v165 = vld [vmem:[#allocation5 + $0x270] sm:$0xff]
    %v166 = vld [vmem:[#allocation5 + $0x278] sm:$0xff]
    %v167 = vld [vmem:[#allocation5 + $0x280] sm:$0xff]
    %v168 = vld [vmem:[#allocation5 + $0x288] sm:$0xff]
    %v169 = vld [vmem:[#allocation5 + $0x290] sm:$0xff]
    %v170 = vld [vmem:[#allocation5 + $0x298] sm:$0xff]
    %v171 = vld [vmem:[#allocation5 + $0x2a0] sm:$0xff]
    %v172 = vld [vmem:[#allocation5 + $0x2a8] sm:$0xff]
    %v173 = vld [vmem:[#allocation5 + $0x2b0] sm:$0xff]
    %v174 = vld [vmem:[#allocation5 + $0x2b8] sm:$0xff]
    %v175 = vld [vmem:[#allocation5 + $0x2c0] sm:$0xff]
    %v176 = vld [vmem:[#allocation5 + $0x2c8] sm:$0xff]
    %v177 = vld [vmem:[#allocation5 + $0x2d0] sm:$0xff]
    %v178 = vld [vmem:[#allocation5 + $0x2d8] sm:$0xff]
    %v179 = vld [vmem:[#allocation5 + $0x2e0] sm:$0xff]
    %v180 = vld [vmem:[#allocation5 + $0x2e8] sm:$0xff]
    %v181 = vld [vmem:[#allocation5 + $0x2f0] sm:$0xff]
    %v182 = vld [vmem:[#allocation5 + $0x2f8] sm:$0xff]
    %v183 = vld [vmem:[#allocation5 + $0x300] sm:$0xff]
    %v184 = vld [vmem:[#allocation5 + $0x308] sm:$0xff]
    %v185 = vld [vmem:[#allocation5 + $0x310] sm:$0xff]
    %v186 = vld [vmem:[#allocation5 + $0x318] sm:$0xff]
    %v187 = vld [vmem:[#allocation5 + $0x320] sm:$0xff]
    %v188 = vld [vmem:[#allocation5 + $0x328] sm:$0xff]
    %v189 = vld [vmem:[#allocation5 + $0x330] sm:$0xff]
    %v190 = vld [vmem:[#allocation5 + $0x338] sm:$0xff]
    %v191 = vld [vmem:[#allocation5 + $0x340] sm:$0xff]
    %v192 = vld [vmem:[#allocation5 + $0x348] sm:$0xff]
    %v193 = vld [vmem:[#allocation5 + $0x350] sm:$0xff]
    %v194 = vld [vmem:[#allocation5 + $0x358] sm:$0xff]
    %v195 = vld [vmem:[#allocation5 + $0x360] sm:$0xff]
    %v196 = vld [vmem:[#allocation5 + $0x368] sm:$0xff]
    %v197 = vld [vmem:[#allocation5 + $0x370] sm:$0xff]
    %v198 = vld [vmem:[#allocation5 + $0x378] sm:$0xff]
    %v199 = vld [vmem:[#allocation5 + $0x380] sm:$0xff]
    %v200 = vld [vmem:[#allocation5 + $0x388] sm:$0xff]
    %v201 = vld [vmem:[#allocation5 + $0x390] sm:$0xff]
    %v202 = vld [vmem:[#allocation5 + $0x398] sm:$0xff]
    %v203 = vld [vmem:[#allocation5 + $0x3a0] sm:$0xff]
    %v204 = vld [vmem:[#allocation5 + $0x3a8] sm:$0xff]
    %v205 = vld [vmem:[#allocation5 + $0x3b0] sm:$0xff]
    %v206 = vld [vmem:[#allocation5 + $0x3b8] sm:$0xff]
    %v207 = vld [vmem:[#allocation5 + $0x3c0] sm:$0xff]
    %v208 = vld [vmem:[#allocation5 + $0x3c8] sm:$0xff]
    %v209 = vld [vmem:[#allocation5 + $0x3d0] sm:$0xff]
    %v210 = vld [vmem:[#allocation5 + $0x3d8] sm:$0xff]
    %v211 = vld [vmem:[#allocation5 + $0x3e0] sm:$0xff]
    %v212 = vld [vmem:[#allocation5 + $0x3e8] sm:$0xff]
    %v213 = vld [vmem:[#allocation5 + $0x3f0] sm:$0xff]
    %v214 = vld [vmem:[#allocation5 + $0x3f8] sm:$0xff]
    %v215 = vld [vmem:[%s0] sm:$0x3]
    %v216 = vld [vmem:[%s3] sm:$0x3]
    %218 = vset.pattern.permute.xlu0 0
    %219 = vperm.xlu0 %218, %v215
    %v220 = vpop.permute.xlu0 %219
    %v223 = vlaneseq
    %v224 = vshrl.u32 %v223, 7
    %v225 = vsub.s32 0, %v224
    %v226 = vrot.slane %v216, %v225
    %v227 = vlaneseq
    %v228 = vshrl.u32 %v227, 7
    %v229 = vsub.s32 1, %v228
    %v230 = vrot.slane %v216, %v229
    %v233 = vmul.f32 %v220, %v226
    %v234 = vmul.f32 %v220, %v230
    %v236 = vcombine.high %v86, %v86
    %v238 = vunpack.c.l.s4 1966171168
    %v239 = vunpack.c.0.s8 %v238
    %v240 = vlaneseq
    %v241 = vshrl.u32 %v240, 7
    %v242 = vsub.s32 %v239, %v241
    %v243 = vrot.slane %v86, %v242
    %v245 = vunpack.c.l.s4 1966171168
    %v246 = vunpack.c.0.s8 %v245
    %v247 = vlaneseq
    %v248 = vshrl.u32 %v247, 7
    %v249 = vsub.s32 %v246, %v248
    %v250 = vrot.slane %v236, %v249
    %v251 = vcombine.high %v243, %v243
    %v252 = vcombine.high %v250, %v250
    %v254 = vunpack.c.l.s4 1966171168
    %v255 = vunpack.c.0.s8 %v254
    %v256 = vlaneseq
    %v257 = vshrl.u32 %v256, 7
    %v258 = vsub.s32 %v255, %v257
    %v259 = vrot.slane %v243, %v258
    %v261 = vunpack.c.l.s4 1966171168
    %v262 = vunpack.c.0.s8 %v261
    %v263 = vlaneseq
    %v264 = vshrl.u32 %v263, 7
    %v265 = vsub.s32 %v262, %v264
    %v266 = vrot.slane %v250, %v265
    %v268 = vunpack.c.l.s4 1966171168
    %v269 = vunpack.c.0.s8 %v268
    %v270 = vlaneseq
    %v271 = vshrl.u32 %v270, 7
    %v272 = vsub.s32 %v269, %v271
    %v273 = vrot.slane %v251, %v272
    %v275 = vunpack.c.l.s4 1966171168
    %v276 = vunpack.c.0.s8 %v275
    %v277 = vlaneseq
    %v278 = vshrl.u32 %v277, 7
    %v279 = vsub.s32 %v276, %v278
    %v280 = vrot.slane %v252, %v279
    %v281 = vcombine.high %v259, %v259
    %v282 = vcombine.high %v266, %v266
    %v283 = vcombine.high %v273, %v273
    %v284 = vcombine.high %v280, %v280
    %v421 = vunpack.c.l.b16 %v87
    %v422 = vunpack.c.h.b16 %v87
    %v423 = vunpack.c.l.b16 %v88
    %v424 = vunpack.c.h.b16 %v88
    %v425 = vunpack.c.l.b16 %v89
    %v426 = vunpack.c.h.b16 %v89
    %v427 = vunpack.c.l.b16 %v90
    %v428 = vunpack.c.h.b16 %v90
    %v429 = vunpack.c.l.b16 %v91
    %v430 = vunpack.c.h.b16 %v91
    %v431 = vunpack.c.l.b16 %v92
    %v432 = vunpack.c.h.b16 %v92
    %v433 = vunpack.c.l.b16 %v93
    %v434 = vunpack.c.h.b16 %v93
    %v435 = vunpack.c.l.b16 %v94
    %v436 = vunpack.c.h.b16 %v94
    %v437 = vunpack.c.l.b16 %v95
    %v438 = vunpack.c.h.b16 %v95
    %v439 = vunpack.c.l.b16 %v96
    %v440 = vunpack.c.h.b16 %v96
    %v441 = vunpack.c.l.b16 %v97
    %v442 = vunpack.c.h.b16 %v97
    %v443 = vunpack.c.l.b16 %v98
    %v444 = vunpack.c.h.b16 %v98
    %v445 = vunpack.c.l.b16 %v99
    %v446 = vunpack.c.h.b16 %v99
    %v447 = vunpack.c.l.b16 %v100
    %v448 = vunpack.c.h.b16 %v100
    %v449 = vunpack.c.l.b16 %v101
    %v450 = vunpack.c.h.b16 %v101
    %v451 = vunpack.c.l.b16 %v102
    %v452 = vunpack.c.h.b16 %v102
    %v453 = vunpack.c.l.b16 %v103
    %v454 = vunpack.c.h.b16 %v103
    %v455 = vunpack.c.l.b16 %v104
    %v456 = vunpack.c.h.b16 %v104
    %v457 = vunpack.c.l.b16 %v105
    %v458 = vunpack.c.h.b16 %v105
    %v459 = vunpack.c.l.b16 %v106
    %v460 = vunpack.c.h.b16 %v106
    %v461 = vunpack.c.l.b16 %v107
    %v462 = vunpack.c.h.b16 %v107
    %v463 = vunpack.c.l.b16 %v108
    %v464 = vunpack.c.h.b16 %v108
    %v465 = vunpack.c.l.b16 %v109
    %v466 = vunpack.c.h.b16 %v109
    %v467 = vunpack.c.l.b16 %v110
    %v468 = vunpack.c.h.b16 %v110
    %v469 = vunpack.c.l.b16 %v111
    %v470 = vunpack.c.h.b16 %v111
    %v471 = vunpack.c.l.b16 %v112
    %v472 = vunpack.c.h.b16 %v112
    %v473 = vunpack.c.l.b16 %v113
    %v474 = vunpack.c.h.b16 %v113
    %v475 = vunpack.c.l.b16 %v114
    %v476 = vunpack.c.h.b16 %v114
    %v477 = vunpack.c.l.b16 %v115
    %v478 = vunpack.c.h.b16 %v115
    %v479 = vunpack.c.l.b16 %v116
    %v480 = vunpack.c.h.b16 %v116
    %v481 = vunpack.c.l.b16 %v117
    %v482 = vunpack.c.h.b16 %v117
    %v483 = vunpack.c.l.b16 %v118
    %v484 = vunpack.c.h.b16 %v118
    %v485 = vunpack.c.l.b16 %v119
    %v486 = vunpack.c.h.b16 %v119
    %v487 = vunpack.c.l.b16 %v120
    %v488 = vunpack.c.h.b16 %v120
    %v489 = vunpack.c.l.b16 %v121
    %v490 = vunpack.c.h.b16 %v121
    %v491 = vunpack.c.l.b16 %v122
    %v492 = vunpack.c.h.b16 %v122
    %v493 = vunpack.c.l.b16 %v123
    %v494 = vunpack.c.h.b16 %v123
    %v495 = vunpack.c.l.b16 %v124
    %v496 = vunpack.c.h.b16 %v124
    %v497 = vunpack.c.l.b16 %v125
    %v498 = vunpack.c.h.b16 %v125
    %v499 = vunpack.c.l.b16 %v126
    %v500 = vunpack.c.h.b16 %v126
    %v501 = vunpack.c.l.b16 %v127
    %v502 = vunpack.c.h.b16 %v127
    %v503 = vunpack.c.l.b16 %v128
    %v504 = vunpack.c.h.b16 %v128
    %v505 = vunpack.c.l.b16 %v129
    %v506 = vunpack.c.h.b16 %v129
    %v507 = vunpack.c.l.b16 %v130
    %v508 = vunpack.c.h.b16 %v130
    %v509 = vunpack.c.l.b16 %v131
    %v510 = vunpack.c.h.b16 %v131
    %v511 = vunpack.c.l.b16 %v132
    %v512 = vunpack.c.h.b16 %v132
    %v513 = vunpack.c.l.b16 %v133
    %v514 = vunpack.c.h.b16 %v133
    %v515 = vunpack.c.l.b16 %v134
    %v516 = vunpack.c.h.b16 %v134
    %v517 = vunpack.c.l.b16 %v135
    %v518 = vunpack.c.h.b16 %v135
    %v519 = vunpack.c.l.b16 %v136
    %v520 = vunpack.c.h.b16 %v136
    %v521 = vunpack.c.l.b16 %v137
    %v522 = vunpack.c.h.b16 %v137
    %v523 = vunpack.c.l.b16 %v138
    %v524 = vunpack.c.h.b16 %v138
    %v525 = vunpack.c.l.b16 %v139
    %v526 = vunpack.c.h.b16 %v139
    %v527 = vunpack.c.l.b16 %v140
    %v528 = vunpack.c.h.b16 %v140
    %v529 = vunpack.c.l.b16 %v141
    %v530 = vunpack.c.h.b16 %v141
    %v531 = vunpack.c.l.b16 %v142
    %v532 = vunpack.c.h.b16 %v142
    %v533 = vunpack.c.l.b16 %v143
    %v534 = vunpack.c.h.b16 %v143
    %v535 = vunpack.c.l.b16 %v144
    %v536 = vunpack.c.h.b16 %v144
    %v537 = vunpack.c.l.b16 %v145
    %v538 = vunpack.c.h.b16 %v145
    %v539 = vunpack.c.l.b16 %v146
    %v540 = vunpack.c.h.b16 %v146
    %v541 = vunpack.c.l.b16 %v147
    %v542 = vunpack.c.h.b16 %v147
    %v543 = vunpack.c.l.b16 %v148
    %v544 = vunpack.c.h.b16 %v148
    %v545 = vunpack.c.l.b16 %v149
    %v546 = vunpack.c.h.b16 %v149
    %v547 = vunpack.c.l.b16 %v150
    %v548 = vunpack.c.h.b16 %v150
    %v549 = vunpack.c.l.b16 %v151
    %v550 = vunpack.c.h.b16 %v151
    %v551 = vunpack.c.l.b16 %v152
    %v552 = vunpack.c.h.b16 %v152
    %v553 = vunpack.c.l.b16 %v153
    %v554 = vunpack.c.h.b16 %v153
    %v555 = vunpack.c.l.b16 %v154
    %v556 = vunpack.c.h.b16 %v154
    %v557 = vunpack.c.l.b16 %v155
    %v558 = vunpack.c.h.b16 %v155
    %v559 = vunpack.c.l.b16 %v156
    %v560 = vunpack.c.h.b16 %v156
    %v561 = vunpack.c.l.b16 %v157
    %v562 = vunpack.c.h.b16 %v157
    %v563 = vunpack.c.l.b16 %v158
    %v564 = vunpack.c.h.b16 %v158
    %v565 = vunpack.c.l.b16 %v159
    %v566 = vunpack.c.h.b16 %v159
    %v567 = vunpack.c.l.b16 %v160
    %v568 = vunpack.c.h.b16 %v160
    %v569 = vunpack.c.l.b16 %v161
    %v570 = vunpack.c.h.b16 %v161
    %v571 = vunpack.c.l.b16 %v162
    %v572 = vunpack.c.h.b16 %v162
    %v573 = vunpack.c.l.b16 %v163
    %v574 = vunpack.c.h.b16 %v163
    %v575 = vunpack.c.l.b16 %v164
    %v576 = vunpack.c.h.b16 %v164
    %v577 = vunpack.c.l.b16 %v165
    %v578 = vunpack.c.h.b16 %v165
    %v579 = vunpack.c.l.b16 %v166
    %v580 = vunpack.c.h.b16 %v166
    %v581 = vunpack.c.l.b16 %v167
    %v582 = vunpack.c.h.b16 %v167
    %v583 = vunpack.c.l.b16 %v168
    %v584 = vunpack.c.h.b16 %v168
    %v585 = vunpack.c.l.b16 %v169
    %v586 = vunpack.c.h.b16 %v169
    %v587 = vunpack.c.l.b16 %v170
    %v588 = vunpack.c.h.b16 %v170
    %v589 = vunpack.c.l.b16 %v171
    %v590 = vunpack.c.h.b16 %v171
    %v591 = vunpack.c.l.b16 %v172
    %v592 = vunpack.c.h.b16 %v172
    %v593 = vunpack.c.l.b16 %v173
    %v594 = vunpack.c.h.b16 %v173
    %v595 = vunpack.c.l.b16 %v174
    %v596 = vunpack.c.h.b16 %v174
    %v597 = vunpack.c.l.b16 %v175
    %v598 = vunpack.c.h.b16 %v175
    %v599 = vunpack.c.l.b16 %v176
    %v600 = vunpack.c.h.b16 %v176
    %v601 = vunpack.c.l.b16 %v177
    %v602 = vunpack.c.h.b16 %v177
    %v603 = vunpack.c.l.b16 %v178
    %v604 = vunpack.c.h.b16 %v178
    %v605 = vunpack.c.l.b16 %v179
    %v606 = vunpack.c.h.b16 %v179
    %v607 = vunpack.c.l.b16 %v180
    %v608 = vunpack.c.h.b16 %v180
    %v609 = vunpack.c.l.b16 %v181
    %v610 = vunpack.c.h.b16 %v181
    %v611 = vunpack.c.l.b16 %v182
    %v612 = vunpack.c.h.b16 %v182
    %v613 = vunpack.c.l.b16 %v183
    %v614 = vunpack.c.h.b16 %v183
    %v615 = vunpack.c.l.b16 %v184
    %v616 = vunpack.c.h.b16 %v184
    %v617 = vunpack.c.l.b16 %v185
    %v618 = vunpack.c.h.b16 %v185
    %v619 = vunpack.c.l.b16 %v186
    %v620 = vunpack.c.h.b16 %v186
    %v621 = vunpack.c.l.b16 %v187
    %v622 = vunpack.c.h.b16 %v187
    %v623 = vunpack.c.l.b16 %v188
    %v624 = vunpack.c.h.b16 %v188
    %v625 = vunpack.c.l.b16 %v189
    %v626 = vunpack.c.h.b16 %v189
    %v627 = vunpack.c.l.b16 %v190
    %v628 = vunpack.c.h.b16 %v190
    %v629 = vunpack.c.l.b16 %v191
    %v630 = vunpack.c.h.b16 %v191
    %v631 = vunpack.c.l.b16 %v192
    %v632 = vunpack.c.h.b16 %v192
    %v633 = vunpack.c.l.b16 %v193
    %v634 = vunpack.c.h.b16 %v193
    %v635 = vunpack.c.l.b16 %v194
    %v636 = vunpack.c.h.b16 %v194
    %v637 = vunpack.c.l.b16 %v195
    %v638 = vunpack.c.h.b16 %v195
    %v639 = vunpack.c.l.b16 %v196
    %v640 = vunpack.c.h.b16 %v196
    %v641 = vunpack.c.l.b16 %v197
    %v642 = vunpack.c.h.b16 %v197
    %v643 = vunpack.c.l.b16 %v198
    %v644 = vunpack.c.h.b16 %v198
    %v645 = vunpack.c.l.b16 %v199
    %v646 = vunpack.c.h.b16 %v199
    %v647 = vunpack.c.l.b16 %v200
    %v648 = vunpack.c.h.b16 %v200
    %v649 = vunpack.c.l.b16 %v201
    %v650 = vunpack.c.h.b16 %v201
    %v651 = vunpack.c.l.b16 %v202
    %v652 = vunpack.c.h.b16 %v202
    %v653 = vunpack.c.l.b16 %v203
    %v654 = vunpack.c.h.b16 %v203
    %v655 = vunpack.c.l.b16 %v204
    %v656 = vunpack.c.h.b16 %v204
    %v657 = vunpack.c.l.b16 %v205
    %v658 = vunpack.c.h.b16 %v205
    %v659 = vunpack.c.l.b16 %v206
    %v660 = vunpack.c.h.b16 %v206
    %v661 = vunpack.c.l.b16 %v207
    %v662 = vunpack.c.h.b16 %v207
    %v663 = vunpack.c.l.b16 %v208
    %v664 = vunpack.c.h.b16 %v208
    %v665 = vunpack.c.l.b16 %v209
    %v666 = vunpack.c.h.b16 %v209
    %v667 = vunpack.c.l.b16 %v210
    %v668 = vunpack.c.h.b16 %v210
    %v669 = vunpack.c.l.b16 %v211
    %v670 = vunpack.c.h.b16 %v211
    %v671 = vunpack.c.l.b16 %v212
    %v672 = vunpack.c.h.b16 %v212
    %v673 = vunpack.c.l.b16 %v213
    %v674 = vunpack.c.h.b16 %v213
    %v675 = vunpack.c.l.b16 %v214
    %v676 = vunpack.c.h.b16 %v214
    %v677 = vpack.c.b16 %v423, %v421
    %v678 = vpack.c.b16 %v424, %v422
    %v679 = vpack.c.b16 %v427, %v425
    %v680 = vpack.c.b16 %v428, %v426
    %v681 = vpack.c.b16 %v431, %v429
    %v682 = vpack.c.b16 %v432, %v430
    %v683 = vpack.c.b16 %v435, %v433
    %v684 = vpack.c.b16 %v436, %v434
    %v685 = vpack.c.b16 %v439, %v437
    %v686 = vpack.c.b16 %v440, %v438
    %v687 = vpack.c.b16 %v443, %v441
    %v688 = vpack.c.b16 %v444, %v442
    %v689 = vpack.c.b16 %v447, %v445
    %v690 = vpack.c.b16 %v448, %v446
    %v691 = vpack.c.b16 %v451, %v449
    %v692 = vpack.c.b16 %v452, %v450
    %v693 = vpack.c.b16 %v455, %v453
    %v694 = vpack.c.b16 %v456, %v454
    %v695 = vpack.c.b16 %v459, %v457
    %v696 = vpack.c.b16 %v460, %v458
    %v697 = vpack.c.b16 %v463, %v461
    %v698 = vpack.c.b16 %v464, %v462
    %v699 = vpack.c.b16 %v467, %v465
    %v700 = vpack.c.b16 %v468, %v466
    %v701 = vpack.c.b16 %v471, %v469
    %v702 = vpack.c.b16 %v472, %v470
    %v703 = vpack.c.b16 %v475, %v473
    %v704 = vpack.c.b16 %v476, %v474
    %v705 = vpack.c.b16 %v479, %v477
    %v706 = vpack.c.b16 %v480, %v478
    %v707 = vpack.c.b16 %v483, %v481
    %v708 = vpack.c.b16 %v484, %v482
    %v709 = vpack.c.b16 %v487, %v485
    %v710 = vpack.c.b16 %v488, %v486
    %v711 = vpack.c.b16 %v491, %v489
    %v712 = vpack.c.b16 %v492, %v490
    %v713 = vpack.c.b16 %v495, %v493
    %v714 = vpack.c.b16 %v496, %v494
    %v715 = vpack.c.b16 %v499, %v497
    %v716 = vpack.c.b16 %v500, %v498
    %v717 = vpack.c.b16 %v503, %v501
    %v718 = vpack.c.b16 %v504, %v502
    %v719 = vpack.c.b16 %v507, %v505
    %v720 = vpack.c.b16 %v508, %v506
    %v721 = vpack.c.b16 %v511, %v509
    %v722 = vpack.c.b16 %v512, %v510
    %v723 = vpack.c.b16 %v515, %v513
    %v724 = vpack.c.b16 %v516, %v514
    %v725 = vpack.c.b16 %v519, %v517
    %v726 = vpack.c.b16 %v520, %v518
    %v727 = vpack.c.b16 %v523, %v521
    %v728 = vpack.c.b16 %v524, %v522
    %v729 = vpack.c.b16 %v527, %v525
    %v730 = vpack.c.b16 %v528, %v526
    %v731 = vpack.c.b16 %v531, %v529
    %v732 = vpack.c.b16 %v532, %v530
    %v733 = vpack.c.b16 %v535, %v533
    %v734 = vpack.c.b16 %v536, %v534
    %v735 = vpack.c.b16 %v539, %v537
    %v736 = vpack.c.b16 %v540, %v538
    %v737 = vpack.c.b16 %v543, %v541
    %v738 = vpack.c.b16 %v544, %v542
    %v739 = vpack.c.b16 %v547, %v545
    %v740 = vpack.c.b16 %v548, %v546
    %v741 = vpack.c.b16 %v551, %v549
    %v742 = vpack.c.b16 %v552, %v550
    %v743 = vpack.c.b16 %v555, %v553
    %v744 = vpack.c.b16 %v556, %v554
    %v745 = vpack.c.b16 %v559, %v557
    %v746 = vpack.c.b16 %v560, %v558
    %v747 = vpack.c.b16 %v563, %v561
    %v748 = vpack.c.b16 %v564, %v562
    %v749 = vpack.c.b16 %v567, %v565
    %v750 = vpack.c.b16 %v568, %v566
    %v751 = vpack.c.b16 %v571, %v569
    %v752 = vpack.c.b16 %v572, %v570
    %v753 = vpack.c.b16 %v575, %v573
    %v754 = vpack.c.b16 %v576, %v574
    %v755 = vpack.c.b16 %v579, %v577
    %v756 = vpack.c.b16 %v580, %v578
    %v757 = vpack.c.b16 %v583, %v581
    %v758 = vpack.c.b16 %v584, %v582
    %v759 = vpack.c.b16 %v587, %v585
    %v760 = vpack.c.b16 %v588, %v586
    %v761 = vpack.c.b16 %v591, %v589
    %v762 = vpack.c.b16 %v592, %v590
    %v763 = vpack.c.b16 %v595, %v593
    %v764 = vpack.c.b16 %v596, %v594
    %v765 = vpack.c.b16 %v599, %v597
    %v766 = vpack.c.b16 %v600, %v598
    %v767 = vpack.c.b16 %v603, %v601
    %v768 = vpack.c.b16 %v604, %v602
    %v769 = vpack.c.b16 %v607, %v605
    %v770 = vpack.c.b16 %v608, %v606
    %v771 = vpack.c.b16 %v611, %v609
    %v772 = vpack.c.b16 %v612, %v610
    %v773 = vpack.c.b16 %v615, %v613
    %v774 = vpack.c.b16 %v616, %v614
    %v775 = vpack.c.b16 %v619, %v617
    %v776 = vpack.c.b16 %v620, %v618
    %v777 = vpack.c.b16 %v623, %v621
    %v778 = vpack.c.b16 %v624, %v622
    %v779 = vpack.c.b16 %v627, %v625
    %v780 = vpack.c.b16 %v628, %v626
    %v781 = vpack.c.b16 %v631, %v629
    %v782 = vpack.c.b16 %v632, %v630
    %v783 = vpack.c.b16 %v635, %v633
    %v784 = vpack.c.b16 %v636, %v634
    %v785 = vpack.c.b16 %v639, %v637
    %v786 = vpack.c.b16 %v640, %v638
    %v787 = vpack.c.b16 %v643, %v641
    %v788 = vpack.c.b16 %v644, %v642
    %v789 = vpack.c.b16 %v647, %v645
    %v790 = vpack.c.b16 %v648, %v646
    %v791 = vpack.c.b16 %v651, %v649
    %v792 = vpack.c.b16 %v652, %v650
    %v793 = vpack.c.b16 %v655, %v653
    %v794 = vpack.c.b16 %v656, %v654
    %v795 = vpack.c.b16 %v659, %v657
    %v796 = vpack.c.b16 %v660, %v658
    %v797 = vpack.c.b16 %v663, %v661
    %v798 = vpack.c.b16 %v664, %v662
    %v799 = vpack.c.b16 %v667, %v665
    %v800 = vpack.c.b16 %v668, %v666
    %v801 = vpack.c.b16 %v671, %v669
    %v802 = vpack.c.b16 %v672, %v670
    %v803 = vpack.c.b16 %v675, %v673
    %v804 = vpack.c.b16 %v676, %v674
    %933 = vmatprep.subr.bf16.mxu0 %v678
    %934 = vmatpush1.bf16.msra.mxu0 %v677
    %935 = vmatprep.subr.bf16.mxu0 %v680
    %936 = vmatpush1.bf16.msra.mxu0 %v679
    %937 = vmatprep.subr.bf16.mxu0 %v682
    %938 = vmatpush1.bf16.msra.mxu0 %v681
    %939 = vmatprep.subr.bf16.mxu0 %v684
    %940 = vmatpush1.bf16.msra.mxu0 %v683
    %941 = vmatprep.subr.bf16.mxu0 %v686
    %942 = vmatpush1.bf16.msra.mxu0 %v685
    %943 = vmatprep.subr.bf16.mxu0 %v688
    %944 = vmatpush1.bf16.msra.mxu0 %v687
    %945 = vmatprep.subr.bf16.mxu0 %v690
    %946 = vmatpush1.bf16.msra.mxu0 %v689
    %947 = vmatprep.subr.bf16.mxu0 %v692
    %948 = vmatpush1.bf16.msra.mxu0 %v691
    %949 = vmatprep.subr.bf16.mxu0 %v694
    %950 = vmatpush1.bf16.msra.mxu0 %v693
    %951 = vmatprep.subr.bf16.mxu0 %v696
    %952 = vmatpush1.bf16.msra.mxu0 %v695
    %953 = vmatprep.subr.bf16.mxu0 %v698
    %954 = vmatpush1.bf16.msra.mxu0 %v697
    %955 = vmatprep.subr.bf16.mxu0 %v700
    %956 = vmatpush1.bf16.msra.mxu0 %v699
    %957 = vmatprep.subr.bf16.mxu0 %v702
    %958 = vmatpush1.bf16.msra.mxu0 %v701
    %959 = vmatprep.subr.bf16.mxu0 %v704
    %960 = vmatpush1.bf16.msra.mxu0 %v703
    %961 = vmatprep.subr.bf16.mxu0 %v706
    %962 = vmatpush1.bf16.msra.mxu0 %v705
    %963 = vmatprep.subr.bf16.mxu0 %v708
    %964 = vmatpush1.bf16.msra.mxu0 %v707
    %965 = vmatprep.mubr.bf16.mxu0 %v273
    %966 = vmatmul.mubr.bf16.gmra.mrb[0].mxu0 %v259
    %v967 = vpop.f32.mrb[0].mxu0
    %v968 = vadd.f32 %v233, %v967
    %v969 = vpop.f32.mrb[0].mxu0
    %v970 = vadd.f32 %v234, %v969
    %v971 = vpop.f32.mrb[0].mxu0
    %v972 = vpop.f32.mrb[0].mxu0
    %973 = vdwg.mxu0
    %974 = vmatprep.subr.bf16.mxu0 %v710
    %975 = vmatpush1.bf16.msra.mxu0 %v709
    %976 = vmatprep.subr.bf16.mxu0 %v712
    %977 = vmatpush1.bf16.msra.mxu0 %v711
    %978 = vmatprep.subr.bf16.mxu0 %v714
    %979 = vmatpush1.bf16.msra.mxu0 %v713
    %980 = vmatprep.subr.bf16.mxu0 %v716
    %981 = vmatpush1.bf16.msra.mxu0 %v715
    %982 = vmatprep.subr.bf16.mxu0 %v718
    %983 = vmatpush1.bf16.msra.mxu0 %v717
    %984 = vmatprep.subr.bf16.mxu0 %v720
    %985 = vmatpush1.bf16.msra.mxu0 %v719
    %986 = vmatprep.subr.bf16.mxu0 %v722
    %987 = vmatpush1.bf16.msra.mxu0 %v721
    %988 = vmatprep.subr.bf16.mxu0 %v724
    %989 = vmatpush1.bf16.msra.mxu0 %v723
    %990 = vmatprep.subr.bf16.mxu0 %v726
    %991 = vmatpush1.bf16.msra.mxu0 %v725
    %992 = vmatprep.subr.bf16.mxu0 %v728
    %993 = vmatpush1.bf16.msra.mxu0 %v727
    %994 = vmatprep.subr.bf16.mxu0 %v730
    %995 = vmatpush1.bf16.msra.mxu0 %v729
    %996 = vmatprep.subr.bf16.mxu0 %v732
    %997 = vmatpush1.bf16.msra.mxu0 %v731
    %998 = vmatprep.subr.bf16.mxu0 %v734
    %999 = vmatpush1.bf16.msra.mxu0 %v733
    %1000 = vmatprep.subr.bf16.mxu0 %v736
    %1001 = vmatpush1.bf16.msra.mxu0 %v735
    %1002 = vmatprep.subr.bf16.mxu0 %v738
    %1003 = vmatpush1.bf16.msra.mxu0 %v737
    %1004 = vmatprep.subr.bf16.mxu0 %v740
    %1005 = vmatpush1.bf16.msra.mxu0 %v739
    %1006 = vmatprep.mubr.bf16.mxu0 %v283
    %1007 = vmatmul.mubr.bf16.gmra.mrb[0].mxu0 %v281
    %v1008 = vpop.f32.mrb[0].mxu0
    %v1009 = vadd.f32 %v968, %v1008
    %v1010 = vpop.f32.mrb[0].mxu0
    %v1011 = vadd.f32 %v970, %v1010
    %v1012 = vpop.f32.mrb[0].mxu0
    %v1013 = vpop.f32.mrb[0].mxu0
    %1014 = vdwg.mxu0
    %1015 = vmatprep.subr.bf16.mxu0 %v742
    %1016 = vmatpush1.bf16.msra.mxu0 %v741
    %1017 = vmatprep.subr.bf16.mxu0 %v744
    %1018 = vmatpush1.bf16.msra.mxu0 %v743
    %1019 = vmatprep.subr.bf16.mxu0 %v746
    %1020 = vmatpush1.bf16.msra.mxu0 %v745
    %1021 = vmatprep.subr.bf16.mxu0 %v748
    %1022 = vmatpush1.bf16.msra.mxu0 %v747
    %1023 = vmatprep.subr.bf16.mxu0 %v750
    %1024 = vmatpush1.bf16.msra.mxu0 %v749
    %1025 = vmatprep.subr.bf16.mxu0 %v752
    %1026 = vmatpush1.bf16.msra.mxu0 %v751
    %1027 = vmatprep.subr.bf16.mxu0 %v754
    %1028 = vmatpush1.bf16.msra.mxu0 %v753
    %1029 = vmatprep.subr.bf16.mxu0 %v756
    %1030 = vmatpush1.bf16.msra.mxu0 %v755
    %1031 = vmatprep.subr.bf16.mxu0 %v758
    %1032 = vmatpush1.bf16.msra.mxu0 %v757
    %1033 = vmatprep.subr.bf16.mxu0 %v760
    %1034 = vmatpush1.bf16.msra.mxu0 %v759
    %1035 = vmatprep.subr.bf16.mxu0 %v762
    %1036 = vmatpush1.bf16.msra.mxu0 %v761
    %1037 = vmatprep.subr.bf16.mxu0 %v764
    %1038 = vmatpush1.bf16.msra.mxu0 %v763
    %1039 = vmatprep.subr.bf16.mxu0 %v766
    %1040 = vmatpush1.bf16.msra.mxu0 %v765
    %1041 = vmatprep.subr.bf16.mxu0 %v768
    %1042 = vmatpush1.bf16.msra.mxu0 %v767
    %1043 = vmatprep.subr.bf16.mxu0 %v770
    %1044 = vmatpush1.bf16.msra.mxu0 %v769
    %1045 = vmatprep.subr.bf16.mxu0 %v772
    %1046 = vmatpush1.bf16.msra.mxu0 %v771
    %1047 = vmatprep.mubr.bf16.mxu0 %v280
    %1048 = vmatmul.mubr.bf16.gmra.mrb[0].mxu0 %v266
    %v1049 = vpop.f32.mrb[0].mxu0
    %v1050 = vadd.f32 %v1009, %v1049
    %v1051 = vpop.f32.mrb[0].mxu0
    %v1052 = vadd.f32 %v1011, %v1051
    %v1053 = vpop.f32.mrb[0].mxu0
    %v1054 = vpop.f32.mrb[0].mxu0
    %1055 = vdwg.mxu0
    %1056 = vmatprep.subr.bf16.mxu0 %v774
    %1057 = vmatpush1.bf16.msra.mxu0 %v773
    %1058 = vmatprep.subr.bf16.mxu0 %v776
    %1059 = vmatpush1.bf16.msra.mxu0 %v775
    %1060 = vmatprep.subr.bf16.mxu0 %v778
    %1061 = vmatpush1.bf16.msra.mxu0 %v777
    %1062 = vmatprep.subr.bf16.mxu0 %v780
    %1063 = vmatpush1.bf16.msra.mxu0 %v779
    %1064 = vmatprep.subr.bf16.mxu0 %v782
    %1065 = vmatpush1.bf16.msra.mxu0 %v781
    %1066 = vmatprep.subr.bf16.mxu0 %v784
    %1067 = vmatpush1.bf16.msra.mxu0 %v783
    %1068 = vmatprep.subr.bf16.mxu0 %v786
    %1069 = vmatpush1.bf16.msra.mxu0 %v785
    %1070 = vmatprep.subr.bf16.mxu0 %v788
    %1071 = vmatpush1.bf16.msra.mxu0 %v787
    %1072 = vmatprep.subr.bf16.mxu0 %v790
    %1073 = vmatpush1.bf16.msra.mxu0 %v789
    %1074 = vmatprep.subr.bf16.mxu0 %v792
    %1075 = vmatpush1.bf16.msra.mxu0 %v791
    %1076 = vmatprep.subr.bf16.mxu0 %v794
    %1077 = vmatpush1.bf16.msra.mxu0 %v793
    %1078 = vmatprep.subr.bf16.mxu0 %v796
    %1079 = vmatpush1.bf16.msra.mxu0 %v795
    %1080 = vmatprep.subr.bf16.mxu0 %v798
    %1081 = vmatpush1.bf16.msra.mxu0 %v797
    %1082 = vmatprep.subr.bf16.mxu0 %v800
    %1083 = vmatpush1.bf16.msra.mxu0 %v799
    %1084 = vmatprep.subr.bf16.mxu0 %v802
    %1085 = vmatpush1.bf16.msra.mxu0 %v801
    %1086 = vmatprep.subr.bf16.mxu0 %v804
    %1087 = vmatpush1.bf16.msra.mxu0 %v803
    %1088 = vmatprep.mubr.bf16.mxu0 %v284
    %1089 = vmatmul.mubr.bf16.gmra.mrb[0].mxu0 %v282
    %v1090 = vpop.f32.mrb[0].mxu0
    %v1091 = vadd.f32 %v1050, %v1090
    %v1092 = vpop.f32.mrb[0].mxu0
    %v1093 = vadd.f32 %v1052, %v1092
    %v1094 = vpop.f32.mrb[0].mxu0
    %v1095 = vpop.f32.mrb[0].mxu0
    %1096 = vdwg.mxu0
    %v1097 = vld [vmem:[%s4] sm:$0x3]
    %v1099 = vlaneseq
    %v1100 = vshrl.u32 %v1099, 7
    %v1101 = vsub.s32 0, %v1100
    %v1102 = vrot.slane %v1097, %v1101
    %v1103 = vlaneseq
    %v1104 = vshrl.u32 %v1103, 7
    %v1105 = vsub.s32 1, %v1104
    %v1106 = vrot.slane %v1097, %v1105
    %v1109 = vadd.f32 %v1091, %v1102
    %v1110 = vadd.f32 %v1093, %v1106
    %v1111 = vxor.u32 %v1109, 2147483648
    %v1112 = vxor.u32 %v1110, 2147483648
    %v1113 = vmul.f32 %v1111, 1.442695
    %v1114 = vpow.pop %v1113
    %v1115 = vmul.f32 %v1112, 1.442695
    %v1116 = vpow.pop %v1115
    %v1117 = vadd.f32 %v1114, 1.0
    %v1118 = vadd.f32 %v1116, 1.0
    %v1119 = vrcp.pop %v1117
    %v1120 = vmul.f32 1.0, %v1119
    %v1121 = vrcp.pop %v1118
    %v1122 = vmul.f32 1.0, %v1121
    %v1123 = vmul.f32 %v1109, %v1120
    %v1124 = vmul.f32 %v1110, %v1122
    %v1125 = vpack.c.bf16 %v1123, %v1123
    %v1126 = vpack.c.bf16 %v1124, %v1124
    %v1127 = vld [vmem:[#allocation7] sm:$0xff]
    %v1128 = vld [vmem:[#allocation7 + $0x8] sm:$0xff]
    %v1129 = vld [vmem:[#allocation7 + $0x10] sm:$0xff]
    %v1130 = vld [vmem:[#allocation7 + $0x18] sm:$0xff]
    %v1131 = vld [vmem:[#allocation7 + $0x20] sm:$0xff]
    %v1132 = vld [vmem:[#allocation7 + $0x28] sm:$0xff]
    %v1133 = vld [vmem:[#allocation7 + $0x30] sm:$0xff]
    %v1134 = vld [vmem:[#allocation7 + $0x38] sm:$0xff]
    %v1135 = vld [vmem:[#allocation7 + $0x40] sm:$0xff]
    %v1136 = vld [vmem:[#allocation7 + $0x48] sm:$0xff]
    %v1137 = vld [vmem:[#allocation7 + $0x50] sm:$0xff]
    %v1138 = vld [vmem:[#allocation7 + $0x58] sm:$0xff]
    %v1139 = vld [vmem:[#allocation7 + $0x60] sm:$0xff]
    %v1140 = vld [vmem:[#allocation7 + $0x68] sm:$0xff]
    %v1141 = vld [vmem:[#allocation7 + $0x70] sm:$0xff]
    %v1142 = vld [vmem:[#allocation7 + $0x78] sm:$0xff]
    %v1143 = vld [vmem:[#allocation7 + $0x80] sm:$0xff]
    %v1144 = vld [vmem:[#allocation7 + $0x88] sm:$0xff]
    %v1145 = vld [vmem:[#allocation7 + $0x90] sm:$0xff]
    %v1146 = vld [vmem:[#allocation7 + $0x98] sm:$0xff]
    %v1147 = vld [vmem:[#allocation7 + $0xa0] sm:$0xff]
    %v1148 = vld [vmem:[#allocation7 + $0xa8] sm:$0xff]
    %v1149 = vld [vmem:[#allocation7 + $0xb0] sm:$0xff]
    %v1150 = vld [vmem:[#allocation7 + $0xb8] sm:$0xff]
    %v1151 = vld [vmem:[#allocation7 + $0xc0] sm:$0xff]
    %v1152 = vld [vmem:[#allocation7 + $0xc8] sm:$0xff]
    %v1153 = vld [vmem:[#allocation7 + $0xd0] sm:$0xff]
    %v1154 = vld [vmem:[#allocation7 + $0xd8] sm:$0xff]
    %v1155 = vld [vmem:[#allocation7 + $0xe0] sm:$0xff]
    %v1156 = vld [vmem:[#allocation7 + $0xe8] sm:$0xff]
    %v1157 = vld [vmem:[#allocation7 + $0xf0] sm:$0xff]
    %v1158 = vld [vmem:[#allocation7 + $0xf8] sm:$0xff]
    %v1159 = vld [vmem:[%s6] sm:$0x3]
    %v1161 = vlaneseq
    %v1162 = vshrl.u32 %v1161, 7
    %v1163 = vsub.s32 0, %v1162
    %v1164 = vrot.slane %v1159, %v1163
    %v1165 = vlaneseq
    %v1166 = vshrl.u32 %v1165, 7
    %v1167 = vsub.s32 1, %v1166
    %v1168 = vrot.slane %v1159, %v1167
    %v1203 = vunpack.c.l.b16 %v1127
    %v1204 = vunpack.c.h.b16 %v1127
    %v1205 = vunpack.c.l.b16 %v1128
    %v1206 = vunpack.c.h.b16 %v1128
    %v1207 = vunpack.c.l.b16 %v1129
    %v1208 = vunpack.c.h.b16 %v1129
    %v1209 = vunpack.c.l.b16 %v1130
    %v1210 = vunpack.c.h.b16 %v1130
    %v1211 = vunpack.c.l.b16 %v1131
    %v1212 = vunpack.c.h.b16 %v1131
    %v1213 = vunpack.c.l.b16 %v1132
    %v1214 = vunpack.c.h.b16 %v1132
    %v1215 = vunpack.c.l.b16 %v1133
    %v1216 = vunpack.c.h.b16 %v1133
    %v1217 = vunpack.c.l.b16 %v1134
    %v1218 = vunpack.c.h.b16 %v1134
    %v1219 = vunpack.c.l.b16 %v1135
    %v1220 = vunpack.c.h.b16 %v1135
    %v1221 = vunpack.c.l.b16 %v1136
    %v1222 = vunpack.c.h.b16 %v1136
    %v1223 = vunpack.c.l.b16 %v1137
    %v1224 = vunpack.c.h.b16 %v1137
    %v1225 = vunpack.c.l.b16 %v1138
    %v1226 = vunpack.c.h.b16 %v1138
    %v1227 = vunpack.c.l.b16 %v1139
    %v1228 = vunpack.c.h.b16 %v1139
    %v1229 = vunpack.c.l.b16 %v1140
    %v1230 = vunpack.c.h.b16 %v1140
    %v1231 = vunpack.c.l.b16 %v1141
    %v1232 = vunpack.c.h.b16 %v1141
    %v1233 = vunpack.c.l.b16 %v1142
    %v1234 = vunpack.c.h.b16 %v1142
    %v1235 = vunpack.c.l.b16 %v1143
    %v1236 = vunpack.c.h.b16 %v1143
    %v1237 = vunpack.c.l.b16 %v1144
    %v1238 = vunpack.c.h.b16 %v1144
    %v1239 = vunpack.c.l.b16 %v1145
    %v1240 = vunpack.c.h.b16 %v1145
    %v1241 = vunpack.c.l.b16 %v1146
    %v1242 = vunpack.c.h.b16 %v1146
    %v1243 = vunpack.c.l.b16 %v1147
    %v1244 = vunpack.c.h.b16 %v1147
    %v1245 = vunpack.c.l.b16 %v1148
    %v1246 = vunpack.c.h.b16 %v1148
    %v1247 = vunpack.c.l.b16 %v1149
    %v1248 = vunpack.c.h.b16 %v1149
    %v1249 = vunpack.c.l.b16 %v1150
    %v1250 = vunpack.c.h.b16 %v1150
    %v1251 = vunpack.c.l.b16 %v1151
    %v1252 = vunpack.c.h.b16 %v1151
    %v1253 = vunpack.c.l.b16 %v1152
    %v1254 = vunpack.c.h.b16 %v1152
    %v1255 = vunpack.c.l.b16 %v1153
    %v1256 = vunpack.c.h.b16 %v1153
    %v1257 = vunpack.c.l.b16 %v1154
    %v1258 = vunpack.c.h.b16 %v1154
    %v1259 = vunpack.c.l.b16 %v1155
    %v1260 = vunpack.c.h.b16 %v1155
    %v1261 = vunpack.c.l.b16 %v1156
    %v1262 = vunpack.c.h.b16 %v1156
    %v1263 = vunpack.c.l.b16 %v1157
    %v1264 = vunpack.c.h.b16 %v1157
    %v1265 = vunpack.c.l.b16 %v1158
    %v1266 = vunpack.c.h.b16 %v1158
    %v1267 = vpack.c.b16 %v1205, %v1203
    %v1268 = vpack.c.b16 %v1206, %v1204
    %v1269 = vpack.c.b16 %v1209, %v1207
    %v1270 = vpack.c.b16 %v1210, %v1208
    %v1271 = vpack.c.b16 %v1213, %v1211
    %v1272 = vpack.c.b16 %v1214, %v1212
    %v1273 = vpack.c.b16 %v1217, %v1215
    %v1274 = vpack.c.b16 %v1218, %v1216
    %v1275 = vpack.c.b16 %v1221, %v1219
    %v1276 = vpack.c.b16 %v1222, %v1220
    %v1277 = vpack.c.b16 %v1225, %v1223
    %v1278 = vpack.c.b16 %v1226, %v1224
    %v1279 = vpack.c.b16 %v1229, %v1227
    %v1280 = vpack.c.b16 %v1230, %v1228
    %v1281 = vpack.c.b16 %v1233, %v1231
    %v1282 = vpack.c.b16 %v1234, %v1232
    %v1283 = vpack.c.b16 %v1237, %v1235
    %v1284 = vpack.c.b16 %v1238, %v1236
    %v1285 = vpack.c.b16 %v1241, %v1239
    %v1286 = vpack.c.b16 %v1242, %v1240
    %v1287 = vpack.c.b16 %v1245, %v1243
    %v1288 = vpack.c.b16 %v1246, %v1244
    %v1289 = vpack.c.b16 %v1249, %v1247
    %v1290 = vpack.c.b16 %v1250, %v1248
    %v1291 = vpack.c.b16 %v1253, %v1251
    %v1292 = vpack.c.b16 %v1254, %v1252
    %v1293 = vpack.c.b16 %v1257, %v1255
    %v1294 = vpack.c.b16 %v1258, %v1256
    %v1295 = vpack.c.b16 %v1261, %v1259
    %v1296 = vpack.c.b16 %v1262, %v1260
    %v1297 = vpack.c.b16 %v1265, %v1263
    %v1298 = vpack.c.b16 %v1266, %v1264
    %1331 = vmatprep.subr.bf16.mxu0 %v1268
    %1332 = vmatpush1.bf16.msra.mxu0 %v1267
    %1333 = vmatprep.subr.bf16.mxu0 %v1270
    %1334 = vmatpush1.bf16.msra.mxu0 %v1269
    %1335 = vmatprep.subr.bf16.mxu0 %v1272
    %1336 = vmatpush1.bf16.msra.mxu0 %v1271
    %1337 = vmatprep.subr.bf16.mxu0 %v1274
    %1338 = vmatpush1.bf16.msra.mxu0 %v1273
    %1339 = vmatprep.subr.bf16.mxu0 %v1276
    %1340 = vmatpush1.bf16.msra.mxu0 %v1275
    %1341 = vmatprep.subr.bf16.mxu0 %v1278
    %1342 = vmatpush1.bf16.msra.mxu0 %v1277
    %1343 = vmatprep.subr.bf16.mxu0 %v1280
    %1344 = vmatpush1.bf16.msra.mxu0 %v1279
    %1345 = vmatprep.subr.bf16.mxu0 %v1282
    %1346 = vmatpush1.bf16.msra.mxu0 %v1281
    %1347 = vmatprep.subr.bf16.mxu0 %v1284
    %1348 = vmatpush1.bf16.msra.mxu0 %v1283
    %1349 = vmatprep.subr.bf16.mxu0 %v1286
    %1350 = vmatpush1.bf16.msra.mxu0 %v1285
    %1351 = vmatprep.subr.bf16.mxu0 %v1288
    %1352 = vmatpush1.bf16.msra.mxu0 %v1287
    %1353 = vmatprep.subr.bf16.mxu0 %v1290
    %1354 = vmatpush1.bf16.msra.mxu0 %v1289
    %1355 = vmatprep.subr.bf16.mxu0 %v1292
    %1356 = vmatpush1.bf16.msra.mxu0 %v1291
    %1357 = vmatprep.subr.bf16.mxu0 %v1294
    %1358 = vmatpush1.bf16.msra.mxu0 %v1293
    %1359 = vmatprep.subr.bf16.mxu0 %v1296
    %1360 = vmatpush1.bf16.msra.mxu0 %v1295
    %1361 = vmatprep.subr.bf16.mxu0 %v1298
    %1362 = vmatpush1.bf16.msra.mxu0 %v1297
    %1363 = vmatprep.mubr.bf16.mxu0 %v1126
    %1364 = vmatmul.mubr.bf16.gmra.mrb[0].mxu0 %v1125
    %v1365 = vpop.f32.mrb[0].mxu0
    %v1366 = vadd.f32 %v1164, %v1365
    %v1367 = vpop.f32.mrb[0].mxu0
    %v1368 = vadd.f32 %v1168, %v1367
    %v1369 = vpop.f32.mrb[0].mxu0
    %v1370 = vpop.f32.mrb[0].mxu0
    %1371 = vdwg.mxu0
    %v1372 = vxor.u32 %v1366, 2147483648
    %v1373 = vxor.u32 %v1368, 2147483648
    %v1374 = vmul.f32 %v1372, 1.442695
    %v1375 = vpow.pop %v1374
    %v1376 = vmul.f32 %v1373, 1.442695
    %v1377 = vpow.pop %v1376
    %v1378 = vadd.f32 %v1375, 1.0
    %v1379 = vadd.f32 %v1377, 1.0
    %v1380 = vrcp.pop %v1378
    %v1381 = vmul.f32 1.0, %v1380
    %v1382 = vrcp.pop %v1379
    %v1383 = vmul.f32 1.0, %v1382
    %v1384 = vmul.f32 %v1366, %v1381
    %v1385 = vmul.f32 %v1368, %v1383
    %v1386 = vpack.c.bf16 %v1384, %v1384
    %v1387 = vpack.c.bf16 %v1385, %v1385
    %v1388 = vld [vmem:[#allocation8] sm:$0xff]
    %v1389 = vld [vmem:[#allocation8 + $0x8] sm:$0xff]
    %v1390 = vld [vmem:[#allocation8 + $0x10] sm:$0xff]
    %v1391 = vld [vmem:[#allocation8 + $0x18] sm:$0xff]
    %v1392 = vld [vmem:[#allocation8 + $0x20] sm:$0xff]
    %v1393 = vld [vmem:[#allocation8 + $0x28] sm:$0xff]
    %v1394 = vld [vmem:[#allocation8 + $0x30] sm:$0xff]
    %v1395 = vld [vmem:[#allocation8 + $0x38] sm:$0xff]
    %v1396 = vld [vmem:[#allocation8 + $0x40] sm:$0xff]
    %v1397 = vld [vmem:[#allocation8 + $0x48] sm:$0xff]
    %v1398 = vld [vmem:[#allocation8 + $0x50] sm:$0xff]
    %v1399 = vld [vmem:[#allocation8 + $0x58] sm:$0xff]
    %v1400 = vld [vmem:[#allocation8 + $0x60] sm:$0xff]
    %v1401 = vld [vmem:[#allocation8 + $0x68] sm:$0xff]
    %v1402 = vld [vmem:[#allocation8 + $0x70] sm:$0xff]
    %v1403 = vld [vmem:[#allocation8 + $0x78] sm:$0xff]
    %v1404 = vld [vmem:[#allocation8 + $0x80] sm:$0xff]
    %v1405 = vld [vmem:[#allocation8 + $0x88] sm:$0xff]
    %v1406 = vld [vmem:[#allocation8 + $0x90] sm:$0xff]
    %v1407 = vld [vmem:[#allocation8 + $0x98] sm:$0xff]
    %v1408 = vld [vmem:[#allocation8 + $0xa0] sm:$0xff]
    %v1409 = vld [vmem:[#allocation8 + $0xa8] sm:$0xff]
    %v1410 = vld [vmem:[#allocation8 + $0xb0] sm:$0xff]
    %v1411 = vld [vmem:[#allocation8 + $0xb8] sm:$0xff]
    %v1412 = vld [vmem:[#allocation8 + $0xc0] sm:$0xff]
    %v1413 = vld [vmem:[#allocation8 + $0xc8] sm:$0xff]
    %v1414 = vld [vmem:[#allocation8 + $0xd0] sm:$0xff]
    %v1415 = vld [vmem:[#allocation8 + $0xd8] sm:$0xff]
    %v1416 = vld [vmem:[#allocation8 + $0xe0] sm:$0xff]
    %v1417 = vld [vmem:[#allocation8 + $0xe8] sm:$0xff]
    %v1418 = vld [vmem:[#allocation8 + $0xf0] sm:$0xff]
    %v1419 = vld [vmem:[#allocation8 + $0xf8] sm:$0xff]
    %v1420 = vld [vmem:[#allocation8 + $0x100] sm:$0xff]
    %v1421 = vld [vmem:[#allocation8 + $0x108] sm:$0xff]
    %v1422 = vld [vmem:[#allocation8 + $0x110] sm:$0xff]
    %v1423 = vld [vmem:[#allocation8 + $0x118] sm:$0xff]
    %v1424 = vld [vmem:[#allocation8 + $0x120] sm:$0xff]
    %v1425 = vld [vmem:[#allocation8 + $0x128] sm:$0xff]
    %v1426 = vld [vmem:[#allocation8 + $0x130] sm:$0xff]
    %v1427 = vld [vmem:[#allocation8 + $0x138] sm:$0xff]
    %v1428 = vld [vmem:[#allocation8 + $0x140] sm:$0xff]
    %v1429 = vld [vmem:[#allocation8 + $0x148] sm:$0xff]
    %v1430 = vld [vmem:[#allocation8 + $0x150] sm:$0xff]
    %v1431 = vld [vmem:[#allocation8 + $0x158] sm:$0xff]
    %v1432 = vld [vmem:[#allocation8 + $0x160] sm:$0xff]
    %v1433 = vld [vmem:[#allocation8 + $0x168] sm:$0xff]
    %v1434 = vld [vmem:[#allocation8 + $0x170] sm:$0xff]
    %v1435 = vld [vmem:[#allocation8 + $0x178] sm:$0xff]
    %v1436 = vld [vmem:[#allocation8 + $0x180] sm:$0xff]
    %v1437 = vld [vmem:[#allocation8 + $0x188] sm:$0xff]
    %v1438 = vld [vmem:[#allocation8 + $0x190] sm:$0xff]
    %v1439 = vld [vmem:[#allocation8 + $0x198] sm:$0xff]
    %v1440 = vld [vmem:[#allocation8 + $0x1a0] sm:$0xff]
    %v1441 = vld [vmem:[#allocation8 + $0x1a8] sm:$0xff]
    %v1442 = vld [vmem:[#allocation8 + $0x1b0] sm:$0xff]
    %v1443 = vld [vmem:[#allocation8 + $0x1b8] sm:$0xff]
    %v1444 = vld [vmem:[#allocation8 + $0x1c0] sm:$0xff]
    %v1445 = vld [vmem:[#allocation8 + $0x1c8] sm:$0xff]
    %v1446 = vld [vmem:[#allocation8 + $0x1d0] sm:$0xff]
    %v1447 = vld [vmem:[#allocation8 + $0x1d8] sm:$0xff]
    %v1448 = vld [vmem:[#allocation8 + $0x1e0] sm:$0xff]
    %v1449 = vld [vmem:[#allocation8 + $0x1e8] sm:$0xff]
    %v1450 = vld [vmem:[#allocation8 + $0x1f0] sm:$0xff]
    %v1451 = vld [vmem:[#allocation8 + $0x1f8] sm:$0xff]
    %v1452 = vld [vmem:[#allocation8 + $0x200] sm:$0xff]
    %v1453 = vld [vmem:[#allocation8 + $0x208] sm:$0xff]
    %v1454 = vld [vmem:[#allocation8 + $0x210] sm:$0xff]
    %v1455 = vld [vmem:[#allocation8 + $0x218] sm:$0xff]
    %v1456 = vld [vmem:[#allocation8 + $0x220] sm:$0xff]
    %v1457 = vld [vmem:[#allocation8 + $0x228] sm:$0xff]
    %v1458 = vld [vmem:[#allocation8 + $0x230] sm:$0xff]
    %v1459 = vld [vmem:[#allocation8 + $0x238] sm:$0xff]
    %v1460 = vld [vmem:[#allocation8 + $0x240] sm:$0xff]
    %v1461 = vld [vmem:[#allocation8 + $0x248] sm:$0xff]
    %v1462 = vld [vmem:[#allocation8 + $0x250] sm:$0xff]
    %v1463 = vld [vmem:[#allocation8 + $0x258] sm:$0xff]
    %v1464 = vld [vmem:[#allocation8 + $0x260] sm:$0xff]
    %v1465 = vld [vmem:[#allocation8 + $0x268] sm:$0xff]
    %v1466 = vld [vmem:[#allocation8 + $0x270] sm:$0xff]
    %v1467 = vld [vmem:[#allocation8 + $0x278] sm:$0xff]
    %v1468 = vld [vmem:[#allocation8 + $0x280] sm:$0xff]
    %v1469 = vld [vmem:[#allocation8 + $0x288] sm:$0xff]
    %v1470 = vld [vmem:[#allocation8 + $0x290] sm:$0xff]
    %v1471 = vld [vmem:[#allocation8 + $0x298] sm:$0xff]
    %v1472 = vld [vmem:[#allocation8 + $0x2a0] sm:$0xff]
    %v1473 = vld [vmem:[#allocation8 + $0x2a8] sm:$0xff]
    %v1474 = vld [vmem:[#allocation8 + $0x2b0] sm:$0xff]
    %v1475 = vld [vmem:[#allocation8 + $0x2b8] sm:$0xff]
    %v1476 = vld [vmem:[#allocation8 + $0x2c0] sm:$0xff]
    %v1477 = vld [vmem:[#allocation8 + $0x2c8] sm:$0xff]
    %v1478 = vld [vmem:[#allocation8 + $0x2d0] sm:$0xff]
    %v1479 = vld [vmem:[#allocation8 + $0x2d8] sm:$0xff]
    %v1480 = vld [vmem:[#allocation8 + $0x2e0] sm:$0xff]
    %v1481 = vld [vmem:[#allocation8 + $0x2e8] sm:$0xff]
    %v1482 = vld [vmem:[#allocation8 + $0x2f0] sm:$0xff]
    %v1483 = vld [vmem:[#allocation8 + $0x2f8] sm:$0xff]
    %v1484 = vld [vmem:[#allocation8 + $0x300] sm:$0xff]
    %v1485 = vld [vmem:[#allocation8 + $0x308] sm:$0xff]
    %v1486 = vld [vmem:[#allocation8 + $0x310] sm:$0xff]
    %v1487 = vld [vmem:[#allocation8 + $0x318] sm:$0xff]
    %v1488 = vld [vmem:[#allocation8 + $0x320] sm:$0xff]
    %v1489 = vld [vmem:[#allocation8 + $0x328] sm:$0xff]
    %v1490 = vld [vmem:[#allocation8 + $0x330] sm:$0xff]
    %v1491 = vld [vmem:[#allocation8 + $0x338] sm:$0xff]
    %v1492 = vld [vmem:[#allocation8 + $0x340] sm:$0xff]
    %v1493 = vld [vmem:[#allocation8 + $0x348] sm:$0xff]
    %v1494 = vld [vmem:[#allocation8 + $0x350] sm:$0xff]
    %v1495 = vld [vmem:[#allocation8 + $0x358] sm:$0xff]
    %v1496 = vld [vmem:[#allocation8 + $0x360] sm:$0xff]
    %v1497 = vld [vmem:[#allocation8 + $0x368] sm:$0xff]
    %v1498 = vld [vmem:[#allocation8 + $0x370] sm:$0xff]
    %v1499 = vld [vmem:[#allocation8 + $0x378] sm:$0xff]
    %v1500 = vld [vmem:[#allocation8 + $0x380] sm:$0xff]
    %v1501 = vld [vmem:[#allocation8 + $0x388] sm:$0xff]
    %v1502 = vld [vmem:[#allocation8 + $0x390] sm:$0xff]
    %v1503 = vld [vmem:[#allocation8 + $0x398] sm:$0xff]
    %v1504 = vld [vmem:[#allocation8 + $0x3a0] sm:$0xff]
    %v1505 = vld [vmem:[#allocation8 + $0x3a8] sm:$0xff]
    %v1506 = vld [vmem:[#allocation8 + $0x3b0] sm:$0xff]
    %v1507 = vld [vmem:[#allocation8 + $0x3b8] sm:$0xff]
    %v1508 = vld [vmem:[#allocation8 + $0x3c0] sm:$0xff]
    %v1509 = vld [vmem:[#allocation8 + $0x3c8] sm:$0xff]
    %v1510 = vld [vmem:[#allocation8 + $0x3d0] sm:$0xff]
    %v1511 = vld [vmem:[#allocation8 + $0x3d8] sm:$0xff]
    %v1512 = vld [vmem:[#allocation8 + $0x3e0] sm:$0xff]
    %v1513 = vld [vmem:[#allocation8 + $0x3e8] sm:$0xff]
    %v1514 = vld [vmem:[#allocation8 + $0x3f0] sm:$0xff]
    %v1515 = vld [vmem:[#allocation8 + $0x3f8] sm:$0xff]
    %v1516 = vld [vmem:[%s8] sm:$0xff]
    %v1518 = vlaneseq
    %v1519 = vshrl.u32 %v1518, 7
    %v1520 = vsub.s32 0, %v1519
    %v1521 = vrot.slane %v1516, %v1520
    %v1522 = vlaneseq
    %v1523 = vshrl.u32 %v1522, 7
    %v1524 = vsub.s32 1, %v1523
    %v1525 = vrot.slane %v1516, %v1524
    %v1526 = vlaneseq
    %v1527 = vshrl.u32 %v1526, 7
    %v1528 = vsub.s32 2, %v1527
    %v1529 = vrot.slane %v1516, %v1528
    %v1530 = vlaneseq
    %v1531 = vshrl.u32 %v1530, 7
    %v1532 = vsub.s32 3, %v1531
    %v1533 = vrot.slane %v1516, %v1532
    %v1534 = vlaneseq
    %v1535 = vshrl.u32 %v1534, 7
    %v1536 = vsub.s32 4, %v1535
    %v1537 = vrot.slane %v1516, %v1536
    %v1538 = vlaneseq
    %v1539 = vshrl.u32 %v1538, 7
    %v1540 = vsub.s32 5, %v1539
    %v1541 = vrot.slane %v1516, %v1540
    %v1542 = vlaneseq
    %v1543 = vshrl.u32 %v1542, 7
    %v1544 = vsub.s32 6, %v1543
    %v1545 = vrot.slane %v1516, %v1544
    %v1546 = vlaneseq
    %v1547 = vshrl.u32 %v1546, 7
    %v1548 = vsub.s32 7, %v1547
    %v1549 = vrot.slane %v1516, %v1548
    %v1686 = vunpack.c.l.b16 %v1388
    %v1687 = vunpack.c.h.b16 %v1388
    %v1688 = vunpack.c.l.b16 %v1389
    %v1689 = vunpack.c.h.b16 %v1389
    %v1690 = vunpack.c.l.b16 %v1390
    %v1691 = vunpack.c.h.b16 %v1390
    %v1692 = vunpack.c.l.b16 %v1391
    %v1693 = vunpack.c.h.b16 %v1391
    %v1694 = vunpack.c.l.b16 %v1392
    %v1695 = vunpack.c.h.b16 %v1392
    %v1696 = vunpack.c.l.b16 %v1393
    %v1697 = vunpack.c.h.b16 %v1393
    %v1698 = vunpack.c.l.b16 %v1394
    %v1699 = vunpack.c.h.b16 %v1394
    %v1700 = vunpack.c.l.b16 %v1395
    %v1701 = vunpack.c.h.b16 %v1395
    %v1702 = vunpack.c.l.b16 %v1396
    %v1703 = vunpack.c.h.b16 %v1396
    %v1704 = vunpack.c.l.b16 %v1397
    %v1705 = vunpack.c.h.b16 %v1397
    %v1706 = vunpack.c.l.b16 %v1398
    %v1707 = vunpack.c.h.b16 %v1398
    %v1708 = vunpack.c.l.b16 %v1399
    %v1709 = vunpack.c.h.b16 %v1399
    %v1710 = vunpack.c.l.b16 %v1400
    %v1711 = vunpack.c.h.b16 %v1400
    %v1712 = vunpack.c.l.b16 %v1401
    %v1713 = vunpack.c.h.b16 %v1401
    %v1714 = vunpack.c.l.b16 %v1402
    %v1715 = vunpack.c.h.b16 %v1402
    %v1716 = vunpack.c.l.b16 %v1403
    %v1717 = vunpack.c.h.b16 %v1403
    %v1718 = vunpack.c.l.b16 %v1404
    %v1719 = vunpack.c.h.b16 %v1404
    %v1720 = vunpack.c.l.b16 %v1405
    %v1721 = vunpack.c.h.b16 %v1405
    %v1722 = vunpack.c.l.b16 %v1406
    %v1723 = vunpack.c.h.b16 %v1406
    %v1724 = vunpack.c.l.b16 %v1407
    %v1725 = vunpack.c.h.b16 %v1407
    %v1726 = vunpack.c.l.b16 %v1408
    %v1727 = vunpack.c.h.b16 %v1408
    %v1728 = vunpack.c.l.b16 %v1409
    %v1729 = vunpack.c.h.b16 %v1409
    %v1730 = vunpack.c.l.b16 %v1410
    %v1731 = vunpack.c.h.b16 %v1410
    %v1732 = vunpack.c.l.b16 %v1411
    %v1733 = vunpack.c.h.b16 %v1411
    %v1734 = vunpack.c.l.b16 %v1412
    %v1735 = vunpack.c.h.b16 %v1412
    %v1736 = vunpack.c.l.b16 %v1413
    %v1737 = vunpack.c.h.b16 %v1413
    %v1738 = vunpack.c.l.b16 %v1414
    %v1739 = vunpack.c.h.b16 %v1414
    %v1740 = vunpack.c.l.b16 %v1415
    %v1741 = vunpack.c.h.b16 %v1415
    %v1742 = vunpack.c.l.b16 %v1416
    %v1743 = vunpack.c.h.b16 %v1416
    %v1744 = vunpack.c.l.b16 %v1417
    %v1745 = vunpack.c.h.b16 %v1417
    %v1746 = vunpack.c.l.b16 %v1418
    %v1747 = vunpack.c.h.b16 %v1418
    %v1748 = vunpack.c.l.b16 %v1419
    %v1749 = vunpack.c.h.b16 %v1419
    %v1750 = vunpack.c.l.b16 %v1420
    %v1751 = vunpack.c.h.b16 %v1420
    %v1752 = vunpack.c.l.b16 %v1421
    %v1753 = vunpack.c.h.b16 %v1421
    %v1754 = vunpack.c.l.b16 %v1422
    %v1755 = vunpack.c.h.b16 %v1422
    %v1756 = vunpack.c.l.b16 %v1423
    %v1757 = vunpack.c.h.b16 %v1423
    %v1758 = vunpack.c.l.b16 %v1424
    %v1759 = vunpack.c.h.b16 %v1424
    %v1760 = vunpack.c.l.b16 %v1425
    %v1761 = vunpack.c.h.b16 %v1425
    %v1762 = vunpack.c.l.b16 %v1426
    %v1763 = vunpack.c.h.b16 %v1426
    %v1764 = vunpack.c.l.b16 %v1427
    %v1765 = vunpack.c.h.b16 %v1427
    %v1766 = vunpack.c.l.b16 %v1428
    %v1767 = vunpack.c.h.b16 %v1428
    %v1768 = vunpack.c.l.b16 %v1429
    %v1769 = vunpack.c.h.b16 %v1429
    %v1770 = vunpack.c.l.b16 %v1430
    %v1771 = vunpack.c.h.b16 %v1430
    %v1772 = vunpack.c.l.b16 %v1431
    %v1773 = vunpack.c.h.b16 %v1431
    %v1774 = vunpack.c.l.b16 %v1432
    %v1775 = vunpack.c.h.b16 %v1432
    %v1776 = vunpack.c.l.b16 %v1433
    %v1777 = vunpack.c.h.b16 %v1433
    %v1778 = vunpack.c.l.b16 %v1434
    %v1779 = vunpack.c.h.b16 %v1434
    %v1780 = vunpack.c.l.b16 %v1435
    %v1781 = vunpack.c.h.b16 %v1435
    %v1782 = vunpack.c.l.b16 %v1436
    %v1783 = vunpack.c.h.b16 %v1436
    %v1784 = vunpack.c.l.b16 %v1437
    %v1785 = vunpack.c.h.b16 %v1437
    %v1786 = vunpack.c.l.b16 %v1438
    %v1787 = vunpack.c.h.b16 %v1438
    %v1788 = vunpack.c.l.b16 %v1439
    %v1789 = vunpack.c.h.b16 %v1439
    %v1790 = vunpack.c.l.b16 %v1440
    %v1791 = vunpack.c.h.b16 %v1440
    %v1792 = vunpack.c.l.b16 %v1441
    %v1793 = vunpack.c.h.b16 %v1441
    %v1794 = vunpack.c.l.b16 %v1442
    %v1795 = vunpack.c.h.b16 %v1442
    %v1796 = vunpack.c.l.b16 %v1443
    %v1797 = vunpack.c.h.b16 %v1443
    %v1798 = vunpack.c.l.b16 %v1444
    %v1799 = vunpack.c.h.b16 %v1444
    %v1800 = vunpack.c.l.b16 %v1445
    %v1801 = vunpack.c.h.b16 %v1445
    %v1802 = vunpack.c.l.b16 %v1446
    %v1803 = vunpack.c.h.b16 %v1446
    %v1804 = vunpack.c.l.b16 %v1447
    %v1805 = vunpack.c.h.b16 %v1447
    %v1806 = vunpack.c.l.b16 %v1448
    %v1807 = vunpack.c.h.b16 %v1448
    %v1808 = vunpack.c.l.b16 %v1449
    %v1809 = vunpack.c.h.b16 %v1449
    %v1810 = vunpack.c.l.b16 %v1450
    %v1811 = vunpack.c.h.b16 %v1450
    %v1812 = vunpack.c.l.b16 %v1451
    %v1813 = vunpack.c.h.b16 %v1451
    %v1814 = vunpack.c.l.b16 %v1452
    %v1815 = vunpack.c.h.b16 %v1452
    %v1816 = vunpack.c.l.b16 %v1453
    %v1817 = vunpack.c.h.b16 %v1453
    %v1818 = vunpack.c.l.b16 %v1454
    %v1819 = vunpack.c.h.b16 %v1454
    %v1820 = vunpack.c.l.b16 %v1455
    %v1821 = vunpack.c.h.b16 %v1455
    %v1822 = vunpack.c.l.b16 %v1456
    %v1823 = vunpack.c.h.b16 %v1456
    %v1824 = vunpack.c.l.b16 %v1457
    %v1825 = vunpack.c.h.b16 %v1457
    %v1826 = vunpack.c.l.b16 %v1458
    %v1827 = vunpack.c.h.b16 %v1458
    %v1828 = vunpack.c.l.b16 %v1459
    %v1829 = vunpack.c.h.b16 %v1459
    %v1830 = vunpack.c.l.b16 %v1460
    %v1831 = vunpack.c.h.b16 %v1460
    %v1832 = vunpack.c.l.b16 %v1461
    %v1833 = vunpack.c.h.b16 %v1461
    %v1834 = vunpack.c.l.b16 %v1462
    %v1835 = vunpack.c.h.b16 %v1462
    %v1836 = vunpack.c.l.b16 %v1463
    %v1837 = vunpack.c.h.b16 %v1463
    %v1838 = vunpack.c.l.b16 %v1464
    %v1839 = vunpack.c.h.b16 %v1464
    %v1840 = vunpack.c.l.b16 %v1465
    %v1841 = vunpack.c.h.b16 %v1465
    %v1842 = vunpack.c.l.b16 %v1466
    %v1843 = vunpack.c.h.b16 %v1466
    %v1844 = vunpack.c.l.b16 %v1467
    %v1845 = vunpack.c.h.b16 %v1467
    %v1846 = vunpack.c.l.b16 %v1468
    %v1847 = vunpack.c.h.b16 %v1468
    %v1848 = vunpack.c.l.b16 %v1469
    %v1849 = vunpack.c.h.b16 %v1469
    %v1850 = vunpack.c.l.b16 %v1470
    %v1851 = vunpack.c.h.b16 %v1470
    %v1852 = vunpack.c.l.b16 %v1471
    %v1853 = vunpack.c.h.b16 %v1471
    %v1854 = vunpack.c.l.b16 %v1472
    %v1855 = vunpack.c.h.b16 %v1472
    %v1856 = vunpack.c.l.b16 %v1473
    %v1857 = vunpack.c.h.b16 %v1473
    %v1858 = vunpack.c.l.b16 %v1474
    %v1859 = vunpack.c.h.b16 %v1474
    %v1860 = vunpack.c.l.b16 %v1475
    %v1861 = vunpack.c.h.b16 %v1475
    %v1862 = vunpack.c.l.b16 %v1476
    %v1863 = vunpack.c.h.b16 %v1476
    %v1864 = vunpack.c.l.b16 %v1477
    %v1865 = vunpack.c.h.b16 %v1477
    %v1866 = vunpack.c.l.b16 %v1478
    %v1867 = vunpack.c.h.b16 %v1478
    %v1868 = vunpack.c.l.b16 %v1479
    %v1869 = vunpack.c.h.b16 %v1479
    %v1870 = vunpack.c.l.b16 %v1480
    %v1871 = vunpack.c.h.b16 %v1480
    %v1872 = vunpack.c.l.b16 %v1481
    %v1873 = vunpack.c.h.b16 %v1481
    %v1874 = vunpack.c.l.b16 %v1482
    %v1875 = vunpack.c.h.b16 %v1482
    %v1876 = vunpack.c.l.b16 %v1483
    %v1877 = vunpack.c.h.b16 %v1483
    %v1878 = vunpack.c.l.b16 %v1484
    %v1879 = vunpack.c.h.b16 %v1484
    %v1880 = vunpack.c.l.b16 %v1485
    %v1881 = vunpack.c.h.b16 %v1485
    %v1882 = vunpack.c.l.b16 %v1486
    %v1883 = vunpack.c.h.b16 %v1486
    %v1884 = vunpack.c.l.b16 %v1487
    %v1885 = vunpack.c.h.b16 %v1487
    %v1886 = vunpack.c.l.b16 %v1488
    %v1887 = vunpack.c.h.b16 %v1488
    %v1888 = vunpack.c.l.b16 %v1489
    %v1889 = vunpack.c.h.b16 %v1489
    %v1890 = vunpack.c.l.b16 %v1490
    %v1891 = vunpack.c.h.b16 %v1490
    %v1892 = vunpack.c.l.b16 %v1491
    %v1893 = vunpack.c.h.b16 %v1491
    %v1894 = vunpack.c.l.b16 %v1492
    %v1895 = vunpack.c.h.b16 %v1492
    %v1896 = vunpack.c.l.b16 %v1493
    %v1897 = vunpack.c.h.b16 %v1493
    %v1898 = vunpack.c.l.b16 %v1494
    %v1899 = vunpack.c.h.b16 %v1494
    %v1900 = vunpack.c.l.b16 %v1495
    %v1901 = vunpack.c.h.b16 %v1495
    %v1902 = vunpack.c.l.b16 %v1496
    %v1903 = vunpack.c.h.b16 %v1496
    %v1904 = vunpack.c.l.b16 %v1497
    %v1905 = vunpack.c.h.b16 %v1497
    %v1906 = vunpack.c.l.b16 %v1498
    %v1907 = vunpack.c.h.b16 %v1498
    %v1908 = vunpack.c.l.b16 %v1499
    %v1909 = vunpack.c.h.b16 %v1499
    %v1910 = vunpack.c.l.b16 %v1500
    %v1911 = vunpack.c.h.b16 %v1500
    %v1912 = vunpack.c.l.b16 %v1501
    %v1913 = vunpack.c.h.b16 %v1501
    %v1914 = vunpack.c.l.b16 %v1502
    %v1915 = vunpack.c.h.b16 %v1502
    %v1916 = vunpack.c.l.b16 %v1503
    %v1917 = vunpack.c.h.b16 %v1503
    %v1918 = vunpack.c.l.b16 %v1504
    %v1919 = vunpack.c.h.b16 %v1504
    %v1920 = vunpack.c.l.b16 %v1505
    %v1921 = vunpack.c.h.b16 %v1505
    %v1922 = vunpack.c.l.b16 %v1506
    %v1923 = vunpack.c.h.b16 %v1506
    %v1924 = vunpack.c.l.b16 %v1507
    %v1925 = vunpack.c.h.b16 %v1507
    %v1926 = vunpack.c.l.b16 %v1508
    %v1927 = vunpack.c.h.b16 %v1508
    %v1928 = vunpack.c.l.b16 %v1509
    %v1929 = vunpack.c.h.b16 %v1509
    %v1930 = vunpack.c.l.b16 %v1510
    %v1931 = vunpack.c.h.b16 %v1510
    %v1932 = vunpack.c.l.b16 %v1511
    %v1933 = vunpack.c.h.b16 %v1511
    %v1934 = vunpack.c.l.b16 %v1512
    %v1935 = vunpack.c.h.b16 %v1512
    %v1936 = vunpack.c.l.b16 %v1513
    %v1937 = vunpack.c.h.b16 %v1513
    %v1938 = vunpack.c.l.b16 %v1514
    %v1939 = vunpack.c.h.b16 %v1514
    %v1940 = vunpack.c.l.b16 %v1515
    %v1941 = vunpack.c.h.b16 %v1515
    %v1942 = vpack.c.b16 %v1694, %v1686
    %v1943 = vpack.c.b16 %v1695, %v1687
    %v1944 = vpack.c.b16 %v1696, %v1688
    %v1945 = vpack.c.b16 %v1697, %v1689
    %v1946 = vpack.c.b16 %v1698, %v1690
    %v1947 = vpack.c.b16 %v1699, %v1691
    %v1948 = vpack.c.b16 %v1700, %v1692
    %v1949 = vpack.c.b16 %v1701, %v1693
    %v1950 = vpack.c.b16 %v1710, %v1702
    %v1951 = vpack.c.b16 %v1711, %v1703
    %v1952 = vpack.c.b16 %v1712, %v1704
    %v1953 = vpack.c.b16 %v1713, %v1705
    %v1954 = vpack.c.b16 %v1714, %v1706
    %v1955 = vpack.c.b16 %v1715, %v1707
    %v1956 = vpack.c.b16 %v1716, %v1708
    %v1957 = vpack.c.b16 %v1717, %v1709
    %v1958 = vpack.c.b16 %v1726, %v1718
    %v1959 = vpack.c.b16 %v1727, %v1719
    %v1960 = vpack.c.b16 %v1728, %v1720
    %v1961 = vpack.c.b16 %v1729, %v1721
    %v1962 = vpack.c.b16 %v1730, %v1722
    %v1963 = vpack.c.b16 %v1731, %v1723
    %v1964 = vpack.c.b16 %v1732, %v1724
    %v1965 = vpack.c.b16 %v1733, %v1725
    %v1966 = vpack.c.b16 %v1742, %v1734
    %v1967 = vpack.c.b16 %v1743, %v1735
    %v1968 = vpack.c.b16 %v1744, %v1736
    %v1969 = vpack.c.b16 %v1745, %v1737
    %v1970 = vpack.c.b16 %v1746, %v1738
    %v1971 = vpack.c.b16 %v1747, %v1739
    %v1972 = vpack.c.b16 %v1748, %v1740
    %v1973 = vpack.c.b16 %v1749, %v1741
    %v1974 = vpack.c.b16 %v1758, %v1750
    %v1975 = vpack.c.b16 %v1759, %v1751
    %v1976 = vpack.c.b16 %v1760, %v1752
    %v1977 = vpack.c.b16 %v1761, %v1753
    %v1978 = vpack.c.b16 %v1762, %v1754
    %v1979 = vpack.c.b16 %v1763, %v1755
    %v1980 = vpack.c.b16 %v1764, %v1756
    %v1981 = vpack.c.b16 %v1765, %v1757
    %v1982 = vpack.c.b16 %v1774, %v1766
    %v1983 = vpack.c.b16 %v1775, %v1767
    %v1984 = vpack.c.b16 %v1776, %v1768
    %v1985 = vpack.c.b16 %v1777, %v1769
    %v1986 = vpack.c.b16 %v1778, %v1770
    %v1987 = vpack.c.b16 %v1779, %v1771
    %v1988 = vpack.c.b16 %v1780, %v1772
    %v1989 = vpack.c.b16 %v1781, %v1773
    %v1990 = vpack.c.b16 %v1790, %v1782
    %v1991 = vpack.c.b16 %v1791, %v1783
    %v1992 = vpack.c.b16 %v1792, %v1784
    %v1993 = vpack.c.b16 %v1793, %v1785
    %v1994 = vpack.c.b16 %v1794, %v1786
    %v1995 = vpack.c.b16 %v1795, %v1787
    %v1996 = vpack.c.b16 %v1796, %v1788
    %v1997 = vpack.c.b16 %v1797, %v1789
    %v1998 = vpack.c.b16 %v1806, %v1798
    %v1999 = vpack.c.b16 %v1807, %v1799
    %v2000 = vpack.c.b16 %v1808, %v1800
    %v2001 = vpack.c.b16 %v1809, %v1801
    %v2002 = vpack.c.b16 %v1810, %v1802
    %v2003 = vpack.c.b16 %v1811, %v1803
    %v2004 = vpack.c.b16 %v1812, %v1804
    %v2005 = vpack.c.b16 %v1813, %v1805
    %v2006 = vpack.c.b16 %v1822, %v1814
    %v2007 = vpack.c.b16 %v1823, %v1815
    %v2008 = vpack.c.b16 %v1824, %v1816
    %v2009 = vpack.c.b16 %v1825, %v1817
    %v2010 = vpack.c.b16 %v1826, %v1818
    %v2011 = vpack.c.b16 %v1827, %v1819
    %v2012 = vpack.c.b16 %v1828, %v1820
    %v2013 = vpack.c.b16 %v1829, %v1821
    %v2014 = vpack.c.b16 %v1838, %v1830
    %v2015 = vpack.c.b16 %v1839, %v1831
    %v2016 = vpack.c.b16 %v1840, %v1832
    %v2017 = vpack.c.b16 %v1841, %v1833
    %v2018 = vpack.c.b16 %v1842, %v1834
    %v2019 = vpack.c.b16 %v1843, %v1835
    %v2020 = vpack.c.b16 %v1844, %v1836
    %v2021 = vpack.c.b16 %v1845, %v1837
    %v2022 = vpack.c.b16 %v1854, %v1846
    %v2023 = vpack.c.b16 %v1855, %v1847
    %v2024 = vpack.c.b16 %v1856, %v1848
    %v2025 = vpack.c.b16 %v1857, %v1849
    %v2026 = vpack.c.b16 %v1858, %v1850
    %v2027 = vpack.c.b16 %v1859, %v1851
    %v2028 = vpack.c.b16 %v1860, %v1852
    %v2029 = vpack.c.b16 %v1861, %v1853
    %v2030 = vpack.c.b16 %v1870, %v1862
    %v2031 = vpack.c.b16 %v1871, %v1863
    %v2032 = vpack.c.b16 %v1872, %v1864
    %v2033 = vpack.c.b16 %v1873, %v1865
    %v2034 = vpack.c.b16 %v1874, %v1866
    %v2035 = vpack.c.b16 %v1875, %v1867
    %v2036 = vpack.c.b16 %v1876, %v1868
    %v2037 = vpack.c.b16 %v1877, %v1869
    %v2038 = vpack.c.b16 %v1886, %v1878
    %v2039 = vpack.c.b16 %v1887, %v1879
    %v2040 = vpack.c.b16 %v1888, %v1880
    %v2041 = vpack.c.b16 %v1889, %v1881
    %v2042 = vpack.c.b16 %v1890, %v1882
    %v2043 = vpack.c.b16 %v1891, %v1883
    %v2044 = vpack.c.b16 %v1892, %v1884
    %v2045 = vpack.c.b16 %v1893, %v1885
    %v2046 = vpack.c.b16 %v1902, %v1894
    %v2047 = vpack.c.b16 %v1903, %v1895
    %v2048 = vpack.c.b16 %v1904, %v1896
    %v2049 = vpack.c.b16 %v1905, %v1897
    %v2050 = vpack.c.b16 %v1906, %v1898
    %v2051 = vpack.c.b16 %v1907, %v1899
    %v2052 = vpack.c.b16 %v1908, %v1900
    %v2053 = vpack.c.b16 %v1909, %v1901
    %v2054 = vpack.c.b16 %v1918, %v1910
    %v2055 = vpack.c.b16 %v1919, %v1911
    %v2056 = vpack.c.b16 %v1920, %v1912
    %v2057 = vpack.c.b16 %v1921, %v1913
    %v2058 = vpack.c.b16 %v1922, %v1914
    %v2059 = vpack.c.b16 %v1923, %v1915
    %v2060 = vpack.c.b16 %v1924, %v1916
    %v2061 = vpack.c.b16 %v1925, %v1917
    %v2062 = vpack.c.b16 %v1934, %v1926
    %v2063 = vpack.c.b16 %v1935, %v1927
    %v2064 = vpack.c.b16 %v1936, %v1928
    %v2065 = vpack.c.b16 %v1937, %v1929
    %v2066 = vpack.c.b16 %v1938, %v1930
    %v2067 = vpack.c.b16 %v1939, %v1931
    %v2068 = vpack.c.b16 %v1940, %v1932
    %v2069 = vpack.c.b16 %v1941, %v1933
    %2198 = vmatprep.subr.bf16.mxu0 %v1943
    %2199 = vmatpush1.bf16.msra.mxu0 %v1942
    %2200 = vmatprep.subr.bf16.mxu0 %v1951
    %2201 = vmatpush1.bf16.msra.mxu0 %v1950
    %2202 = vmatprep.subr.bf16.mxu0 %v1959
    %2203 = vmatpush1.bf16.msra.mxu0 %v1958
    %2204 = vmatprep.subr.bf16.mxu0 %v1967
    %2205 = vmatpush1.bf16.msra.mxu0 %v1966
    %2206 = vmatprep.subr.bf16.mxu0 %v1975
    %2207 = vmatpush1.bf16.msra.mxu0 %v1974
    %2208 = vmatprep.subr.bf16.mxu0 %v1983
    %2209 = vmatpush1.bf16.msra.mxu0 %v1982
    %2210 = vmatprep.subr.bf16.mxu0 %v1991
    %2211 = vmatpush1.bf16.msra.mxu0 %v1990
    %2212 = vmatprep.subr.bf16.mxu0 %v1999
    %2213 = vmatpush1.bf16.msra.mxu0 %v1998
    %2214 = vmatprep.subr.bf16.mxu0 %v2007
    %2215 = vmatpush1.bf16.msra.mxu0 %v2006
    %2216 = vmatprep.subr.bf16.mxu0 %v2015
    %2217 = vmatpush1.bf16.msra.mxu0 %v2014
    %2218 = vmatprep.subr.bf16.mxu0 %v2023
    %2219 = vmatpush1.bf16.msra.mxu0 %v2022
    %2220 = vmatprep.subr.bf16.mxu0 %v2031
    %2221 = vmatpush1.bf16.msra.mxu0 %v2030
    %2222 = vmatprep.subr.bf16.mxu0 %v2039
    %2223 = vmatpush1.bf16.msra.mxu0 %v2038
    %2224 = vmatprep.subr.bf16.mxu0 %v2047
    %2225 = vmatpush1.bf16.msra.mxu0 %v2046
    %2226 = vmatprep.subr.bf16.mxu0 %v2055
    %2227 = vmatpush1.bf16.msra.mxu0 %v2054
    %2228 = vmatprep.subr.bf16.mxu0 %v2063
    %2229 = vmatpush1.bf16.msra.mxu0 %v2062
    %2230 = vmatprep.mubr.bf16.mxu0 %v1387
    %2231 = vmatmul.mubr.bf16.gmra.mrb[0].mxu0 %v1386
    %v2232 = vpop.f32.mrb[0].mxu0
    %v2233 = vadd.f32 %v1521, %v2232
    %v2234 = vpop.f32.mrb[0].mxu0
    %v2235 = vadd.f32 %v1525, %v2234
    %v2236 = vpop.f32.mrb[0].mxu0
    %v2237 = vpop.f32.mrb[0].mxu0
    %2238 = vdwg.mxu0
    %2239 = vmatprep.subr.bf16.mxu0 %v1945
    %2240 = vmatpush1.bf16.msra.mxu0 %v1944
    %2241 = vmatprep.subr.bf16.mxu0 %v1953
    %2242 = vmatpush1.bf16.msra.mxu0 %v1952
    %2243 = vmatprep.subr.bf16.mxu0 %v1961
    %2244 = vmatpush1.bf16.msra.mxu0 %v1960
    %2245 = vmatprep.subr.bf16.mxu0 %v1969
    %2246 = vmatpush1.bf16.msra.mxu0 %v1968
    %2247 = vmatprep.subr.bf16.mxu0 %v1977
    %2248 = vmatpush1.bf16.msra.mxu0 %v1976
    %2249 = vmatprep.subr.bf16.mxu0 %v1985
    %2250 = vmatpush1.bf16.msra.mxu0 %v1984
    %2251 = vmatprep.subr.bf16.mxu0 %v1993
    %2252 = vmatpush1.bf16.msra.mxu0 %v1992
    %2253 = vmatprep.subr.bf16.mxu0 %v2001
    %2254 = vmatpush1.bf16.msra.mxu0 %v2000
    %2255 = vmatprep.subr.bf16.mxu0 %v2009
    %2256 = vmatpush1.bf16.msra.mxu0 %v2008
    %2257 = vmatprep.subr.bf16.mxu0 %v2017
    %2258 = vmatpush1.bf16.msra.mxu0 %v2016
    %2259 = vmatprep.subr.bf16.mxu0 %v2025
    %2260 = vmatpush1.bf16.msra.mxu0 %v2024
    %2261 = vmatprep.subr.bf16.mxu0 %v2033
    %2262 = vmatpush1.bf16.msra.mxu0 %v2032
    %2263 = vmatprep.subr.bf16.mxu0 %v2041
    %2264 = vmatpush1.bf16.msra.mxu0 %v2040
    %2265 = vmatprep.subr.bf16.mxu0 %v2049
    %2266 = vmatpush1.bf16.msra.mxu0 %v2048
    %2267 = vmatprep.subr.bf16.mxu0 %v2057
    %2268 = vmatpush1.bf16.msra.mxu0 %v2056
    %2269 = vmatprep.subr.bf16.mxu0 %v2065
    %2270 = vmatpush1.bf16.msra.mxu0 %v2064
    %2271 = vmatprep.mubr.bf16.mxu0 %v1387
    %2272 = vmatmul.mubr.bf16.gmra.mrb[0].mxu0 %v1386
    %v2273 = vpop.f32.mrb[0].mxu0
    %v2274 = vadd.f32 %v1529, %v2273
    %v2275 = vpop.f32.mrb[0].mxu0
    %v2276 = vadd.f32 %v1533, %v2275
    %v2277 = vpop.f32.mrb[0].mxu0
    %v2278 = vpop.f32.mrb[0].mxu0
    %2279 = vdwg.mxu0
    %2280 = vmatprep.subr.bf16.mxu0 %v1947
    %2281 = vmatpush1.bf16.msra.mxu0 %v1946
    %2282 = vmatprep.subr.bf16.mxu0 %v1955
    %2283 = vmatpush1.bf16.msra.mxu0 %v1954
    %2284 = vmatprep.subr.bf16.mxu0 %v1963
    %2285 = vmatpush1.bf16.msra.mxu0 %v1962
    %2286 = vmatprep.subr.bf16.mxu0 %v1971
    %2287 = vmatpush1.bf16.msra.mxu0 %v1970
    %2288 = vmatprep.subr.bf16.mxu0 %v1979
    %2289 = vmatpush1.bf16.msra.mxu0 %v1978
    %2290 = vmatprep.subr.bf16.mxu0 %v1987
    %2291 = vmatpush1.bf16.msra.mxu0 %v1986
    %2292 = vmatprep.subr.bf16.mxu0 %v1995
    %2293 = vmatpush1.bf16.msra.mxu0 %v1994
    %2294 = vmatprep.subr.bf16.mxu0 %v2003
    %2295 = vmatpush1.bf16.msra.mxu0 %v2002
    %2296 = vmatprep.subr.bf16.mxu0 %v2011
    %2297 = vmatpush1.bf16.msra.mxu0 %v2010
    %2298 = vmatprep.subr.bf16.mxu0 %v2019
    %2299 = vmatpush1.bf16.msra.mxu0 %v2018
    %2300 = vmatprep.subr.bf16.mxu0 %v2027
    %2301 = vmatpush1.bf16.msra.mxu0 %v2026
    %2302 = vmatprep.subr.bf16.mxu0 %v2035
    %2303 = vmatpush1.bf16.msra.mxu0 %v2034
    %2304 = vmatprep.subr.bf16.mxu0 %v2043
    %2305 = vmatpush1.bf16.msra.mxu0 %v2042
    %2306 = vmatprep.subr.bf16.mxu0 %v2051
    %2307 = vmatpush1.bf16.msra.mxu0 %v2050
    %2308 = vmatprep.subr.bf16.mxu0 %v2059
    %2309 = vmatpush1.bf16.msra.mxu0 %v2058
    %2310 = vmatprep.subr.bf16.mxu0 %v2067
    %2311 = vmatpush1.bf16.msra.mxu0 %v2066
    %2312 = vmatprep.mubr.bf16.mxu0 %v1387
    %2313 = vmatmul.mubr.bf16.gmra.mrb[0].mxu0 %v1386
    %v2314 = vpop.f32.mrb[0].mxu0
    %v2315 = vadd.f32 %v1537, %v2314
    %v2316 = vpop.f32.mrb[0].mxu0
    %v2317 = vadd.f32 %v1541, %v2316
    %v2318 = vpop.f32.mrb[0].mxu0
    %v2319 = vpop.f32.mrb[0].mxu0
    %2320 = vdwg.mxu0
    %2321 = vmatprep.subr.bf16.mxu0 %v1949
    %2322 = vmatpush1.bf16.msra.mxu0 %v1948
    %2323 = vmatprep.subr.bf16.mxu0 %v1957
    %2324 = vmatpush1.bf16.msra.mxu0 %v1956
    %2325 = vmatprep.subr.bf16.mxu0 %v1965
    %2326 = vmatpush1.bf16.msra.mxu0 %v1964
    %2327 = vmatprep.subr.bf16.mxu0 %v1973
    %2328 = vmatpush1.bf16.msra.mxu0 %v1972
    %2329 = vmatprep.subr.bf16.mxu0 %v1981
    %2330 = vmatpush1.bf16.msra.mxu0 %v1980
    %2331 = vmatprep.subr.bf16.mxu0 %v1989
    %2332 = vmatpush1.bf16.msra.mxu0 %v1988
    %2333 = vmatprep.subr.bf16.mxu0 %v1997
    %2334 = vmatpush1.bf16.msra.mxu0 %v1996
    %2335 = vmatprep.subr.bf16.mxu0 %v2005
    %2336 = vmatpush1.bf16.msra.mxu0 %v2004
    %2337 = vmatprep.subr.bf16.mxu0 %v2013
    %2338 = vmatpush1.bf16.msra.mxu0 %v2012
    %2339 = vmatprep.subr.bf16.mxu0 %v2021
    %2340 = vmatpush1.bf16.msra.mxu0 %v2020
    %2341 = vmatprep.subr.bf16.mxu0 %v2029
    %2342 = vmatpush1.bf16.msra.mxu0 %v2028
    %2343 = vmatprep.subr.bf16.mxu0 %v2037
    %2344 = vmatpush1.bf16.msra.mxu0 %v2036
    %2345 = vmatprep.subr.bf16.mxu0 %v2045
    %2346 = vmatpush1.bf16.msra.mxu0 %v2044
    %2347 = vmatprep.subr.bf16.mxu0 %v2053
    %2348 = vmatpush1.bf16.msra.mxu0 %v2052
    %2349 = vmatprep.subr.bf16.mxu0 %v2061
    %2350 = vmatpush1.bf16.msra.mxu0 %v2060
    %2351 = vmatprep.subr.bf16.mxu0 %v2069
    %2352 = vmatpush1.bf16.msra.mxu0 %v2068
    %2353 = vmatprep.mubr.bf16.mxu0 %v1387
    %2354 = vmatmul.mubr.bf16.gmra.mrb[0].mxu0 %v1386
    %v2355 = vpop.f32.mrb[0].mxu0
    %v2356 = vadd.f32 %v1545, %v2355
    %v2357 = vpop.f32.mrb[0].mxu0
    %v2358 = vadd.f32 %v1549, %v2357
    %v2359 = vpop.f32.mrb[0].mxu0
    %v2360 = vpop.f32.mrb[0].mxu0
    %2361 = vdwg.mxu0
    %v2362 = vpack.c.bf16 %v2233, %v2233
    %v2363 = vpack.c.bf16 %v2235, %v2235
    %v2364 = vpack.c.bf16 %v2274, %v2274
    %v2365 = vpack.c.bf16 %v2276, %v2276
    %v2366 = vpack.c.bf16 %v2315, %v2315
    %v2367 = vpack.c.bf16 %v2317, %v2317
    %v2368 = vpack.c.bf16 %v2356, %v2356
    %v2369 = vpack.c.bf16 %v2358, %v2358
    %v2378 = vcombine.low %v2362, %v2363
    %v2379 = vcombine.low %v2364, %v2365
    %v2380 = vcombine.low %v2366, %v2367
    %v2381 = vcombine.low %v2368, %v2369
    %v2383 = vunpack.c.l.s4 1966171168
    %v2384 = vunpack.c.0.s8 %v2383
    %v2385 = vlaneseq
    %v2386 = vshrl.u32 %v2385, 7
    %v2387 = vsub.s32 %v2384, %v2386
    %v2388 = vrot.slane %v2378, %v2387
    %v2390 = vunpack.c.l.s4 1966171168
    %v2391 = vunpack.c.0.s8 %v2390
    %v2392 = vlaneseq
    %v2393 = vshrl.u32 %v2392, 7
    %v2394 = vsub.s32 %v2391, %v2393
    %v2395 = vrot.slane %v2379, %v2394
    %v2397 = vunpack.c.l.s4 1966171168
    %v2398 = vunpack.c.0.s8 %v2397
    %v2399 = vlaneseq
    %v2400 = vshrl.u32 %v2399, 7
    %v2401 = vsub.s32 %v2398, %v2400
    %v2402 = vrot.slane %v2380, %v2401
    %v2404 = vunpack.c.l.s4 1966171168
    %v2405 = vunpack.c.0.s8 %v2404
    %v2406 = vlaneseq
    %v2407 = vshrl.u32 %v2406, 7
    %v2408 = vsub.s32 %v2405, %v2407
    %v2409 = vrot.slane %v2381, %v2408
    %v2410 = vcombine.low %v2388, %v2395
    %v2411 = vcombine.low %v2402, %v2409
    %v2413 = vunpack.c.l.s4 1966171168
    %v2414 = vunpack.c.0.s8 %v2413
    %v2415 = vlaneseq
    %v2416 = vshrl.u32 %v2415, 7
    %v2417 = vsub.s32 %v2414, %v2416
    %v2418 = vrot.slane %v2410, %v2417
    %v2420 = vunpack.c.l.s4 1966171168
    %v2421 = vunpack.c.0.s8 %v2420
    %v2422 = vlaneseq
    %v2423 = vshrl.u32 %v2422, 7
    %v2424 = vsub.s32 %v2421, %v2423
    %v2425 = vrot.slane %v2411, %v2424
    %v2426 = vcombine.low %v2418, %v2425
    %2428 = vst [vmem:[#allocation10] sm:$0xff] %v2426
    // Predicated region
    $region54: #{tpu_custom_call.1} parent=1 // pred_check
      _
    $region55: #{tpu_custom_call.1} parent=1 // pred_check_branch
      %2430 = sbr.rel (0) target = $region57
    $region56: #{tpu_custom_call.1} parent=1 // pred_region
      %s2432 = ssub.s32 128, 128
      %2433 = vsyncadd [#allocation4], %s2432
      %s2435 = sshll.u32 [#allocation10], 4
      %s2436 = int_to_ptr.vmem [resolvable:$true] %s2435
      %2438 = dma.vmem_to_hbm [thread:$0]  %s2436, 128, %s9, [#allocation4]
    $region57: #{tpu_custom_call.1} parent=1 // pred_fallthru
      _
    // Predicated region
    $region58: #{tpu_custom_call.1} parent=1 // pred_check
      _
    $region59: #{tpu_custom_call.1} parent=1 // pred_check_branch
      %2440 = sbr.rel (0) target = $region61
    $region60: #{tpu_custom_call.1} parent=1 // pred_region
      %2441 = dma.done [#allocation4], 128
    $region61: #{tpu_custom_call.1} parent=1 // pred_fallthru
      _
    %2442 = vsyncpa [#allocation3], 1
    %2443 = vsyncpa [#allocation6], 1
    %2444 = vsyncpa [#allocation9], 1
    %2445 = vsyncpa [#allocation4], 1

</llo_original>
